<compile_context>
chip_gen: v6e
topology: v6e:2x2x1
jax: 0.10.0
libtpu: 0.0.40
codegen_flags: <defaults>
</compile_context>

<pallas_src>
import functools

import jax
import jax.numpy as jnp
from jax.experimental import pallas as pl
from jax.experimental.pallas import tpu as pltpu

_MAX_BLOCK_ROWS = 512   # per review: single big batch block (512 captures the win)


def _round_up(x: int, m: int) -> int:
    return (x + m - 1) // m * m


def _num_tensorcores() -> int:
    """2 on v7x (dual TensorCore per chip), else 1.  Used to size the batch grid."""
    try:
        info = pltpu.get_tpu_info()
        n = getattr(info, "num_cores", None)
        if isinstance(n, int) and n in (1, 2):
            return n
        ver = (str(getattr(info, "chip_version", "")) + str(getattr(info, "version", ""))).lower()
        if "7" in ver:
            return 2
    except Exception:
        pass
    try:
        kind = jax.devices()[0].device_kind.lower()
        if "v7" in kind or "7x" in kind:
            return 2
    except Exception:
        pass
    return 1


def _dynamics_kernel(act_ref, h_ref, wb_ref, fs_ref, out_ref, *,
                     hidden_size: int, actions: int, out_width: int, steps: int):
    H, A, P, K = hidden_size, actions, out_width, steps
    Bb = h_ref.shape[0]
    f32, bf16 = jnp.float32, jnp.bfloat16

    # ---- static slices of the two packed operand slabs ----
    b1 = fs_ref[0:1, 0:256]              # fused first-layer bias [b1r | b1h]   (1,256)
    b2h = fs_ref[1:2, 0:128]             # hidden 2nd-layer bias                (1,128)
    w2r = fs_ref[2:3, 0:128]             # reward 2nd-layer weight row          (1,128)
    b2r = fs_ref[2:3, 128:129]           # reward 2nd-layer bias                (1,1)
    bout = fs_ref[3:4, 0:P]              # b3h in cols [0,H), zeros elsewhere   (1,P)
    w1a = fs_ref[4:4 + A, 0:256]         # action rows of fused first layer, f32 (A,256)
    b3h = bout[:, 0:H]                   # hidden 3rd-layer bias                (1,H)

    w2h = wb_ref[0:128, 0:128]           # bf16
    w3h_p = wb_ref[128:256, 0:P]         # bf16, zero-padded cols >= H
    w1h = wb_ref[256:256 + H, 0:256]     # bf16, h-rows of fused [w1r | w1h]

    act = act_ref[...]                   # (Bb, K) int32 action indices
    zeros256 = jnp.zeros((Bb, 256), f32)  # hoisted: not rebuilt per step

    h_cur = h_ref[...]                   # (Bb, H) f32 carried hidden state
    rewards = []
    out = None
    for s in range(K):                   # K static & small -> fully unrolled
        # action contribution: A predicated VPU selects (no MXU push, no one-hot DMA)
        a_s = act[:, s:s + 1]            # (Bb, 1)
        a_contrib = zeros256
        for k in range(A):
            a_contrib = jnp.where(a_s == k, w1a[k:k + 1, :], a_contrib)

        # fused first layer: reward branch cols [0,128) | hidden branch cols [128,256)
        z1 = jnp.dot(h_cur.astype(bf16), w1h, preferred_element_type=f32)
        z1 = jnp.maximum(z1 + b1 + a_contrib, 0.0)

        # reward head: lane reduction instead of a (Bb,128)@(128,1) MXU matmul
        rewards.append(jnp.sum(z1[:, 0:128] * w2r, axis=-1, keepdims=True) + b2r)

        # hidden head: Linear(128,128) -> ReLU -> Linear(128,H)
        t = jnp.dot(z1[:, 128:256].astype(bf16), w2h, preferred_element_type=f32)
        t = jnp.maximum(t + b2h, 0.0)
        nh = jnp.dot(t.astype(bf16), w3h_p, preferred_element_type=f32)   # (Bb, P)
        if s + 1 < K:
            h_cur = nh[:, 0:H] + b3h     # carried state stays on-chip
        else:
            out = nh + bout              # final step keeps the packed (Bb, P) tile

    # pack per-step rewards into lanes [H, H+K) of the lane-dense output tile
    col = jax.lax.broadcasted_iota(jnp.int32, out.shape, 1)
    for s in range(K):
        out = jnp.where(col == H + s, rewards[s], out)
    # TODO(synk): emit bf16 here (halves vst/HBM writeback) once the consumer
    # accepts a bf16 hidden state; kept f32 to match the PyTorch module outputs.
    out_ref[...] = out


def init_params(key, actions: int, hidden_size: int):
    """PyTorch-shaped parameters, f32, weights as (in_features, out_features)."""
    d_in = hidden_size + actions
    keys = jax.random.split(key, 10)

    def lin(kw, kb, fan_in, fan_out):
        bound = 1.0 / jnp.sqrt(float(fan_in))
        w = jax.random.uniform(kw, (fan_in, fan_out), jnp.float32, -bound, bound)
        b = jax.random.uniform(kb, (1, fan_out), jnp.float32, -bound, bound)
        return w, b

    w1r, b1r = lin(keys[0], keys[1], d_in, 128)
    w2r, b2r = lin(keys[2], keys[3], 128, 1)
    w1h, b1h = lin(keys[4], keys[5], d_in, 128)
    w2h, b2h = lin(keys[6], keys[7], 128, 128)
    w3h, b3h = lin(keys[8], keys[9], 128, hidden_size)
    return dict(w1r=w1r, b1r=b1r, w2r=w2r, b2r=b2r,
                w1h=w1h, b1h=b1h, w2h=w2h, b2h=b2h, w3h=w3h, b3h=b3h)


def pack_params(params, actions: int, hidden_size: int, max_unroll: int = 8):
    """One-time fusion of the PyTorch-shaped params into TWO kernel operands."""
    H, A = hidden_size, actions
    width = max(256, _round_up(H + max(1, max_unroll), 128))

    # Fused first layer: columns [0,128) = reward branch, [128,256) = hidden branch.
    w1 = jnp.concatenate([params["w1r"], params["w1h"]], axis=1)   # (H+A, 256)
    b1 = jnp.concatenate([params["b1r"], params["b1h"]], axis=1)   # (1, 256)

    # bf16 slab: everything that feeds the MXU, one DMA.
    #   rows [0,128)     : w2h        cols [0,128)
    #   rows [128,256)   : w3h        cols [0,H)
    #   rows [256,256+H) : w1[:H]     cols [0,256)
    wb = jnp.zeros((256 + H, width), jnp.float32)
    wb = wb.at[0:128, 0:128].set(params["w2h"])
    wb = wb.at[128:256, 0:H].set(params["w3h"])
    wb = wb.at[256:256 + H, 0:256].set(w1[:H])
    wb = wb.astype(jnp.bfloat16)

    # f32 slab: biases + reward row + action rows of the fused first layer.
    #   row 0      : b1 (fused)            cols [0,256)
    #   row 1      : b2h                   cols [0,128)
    #   row 2      : w2r row, b2r at col 128
    #   row 3      : b3h                   cols [0,H)   (packed output bias)
    #   rows [4,4+A): w1[H:]               cols [0,256)
    fs = jnp.zeros((4 + A, width), jnp.float32)
    fs = fs.at[0, 0:256].set(b1[0])
    fs = fs.at[1, 0:128].set(params["b2h"][0])
    fs = fs.at[2, 0:128].set(params["w2r"][:, 0])
    fs = fs.at[2, 128].set(params["b2r"][0, 0])
    fs = fs.at[3, 0:H].set(params["b3h"][0])
    fs = fs.at[4:4 + A, 0:256].set(w1[H:])
    return dict(wb=wb, fs=fs)


def dynamics_unroll(h, action_idx, packed):
    """Fused K-step dynamics unroll in ONE pallas_call.

    h:          (B, H) f32 hidden states
    action_idx: (B, K) int32 action indices (step s = column s)
    returns (rewards (B, K) f32, final hidden (B, H) f32)
    """
    B, H = h.shape
    K = action_idx.shape[1]
    wb, fs = packed["wb"], packed["fs"]
    A = fs.shape[0] - 4
    P = max(128, _round_up(H + K, 128))
    if P > wb.shape[1] or P > fs.shape[1]:
        raise ValueError("packed slabs too narrow for this unroll; re-pack with larger max_unroll")
    assert wb.shape[0] == 256 + H, "packed wb slab does not match hidden_size"

    # One grid step on single-TC v5e/v6e, ~one step per TensorCore on v7x.
    num_tc = _num_tensorcores()
    block_b = min(_MAX_BLOCK_ROWS, _round_up(pl.cdiv(B, num_tc), 16))
    b_pad = _round_up(B, block_b)
    grid = (b_pad // block_b,)

    act = action_idx.astype(jnp.int32)
    h_in = h
    if b_pad != B:
        h_in = jnp.pad(h_in, ((0, b_pad - B), (0, 0)))
        act = jnp.pad(act, ((0, b_pad - B), (0, 0)))

    kernel = functools.partial(_dynamics_kernel, hidden_size=H, actions=A,
                               out_width=P, steps=K)

    flops = 2 * b_pad * K * (H * 256 + 128 * 128 + 128 * P + 128)
    bytes_accessed = int(h_in.size * 4 + act.size * 4 + wb.size * 2
                         + fs.size * 4 + b_pad * P * 4)

    out = pl.pallas_call(
        kernel,
        out_shape=jax.ShapeDtypeStruct((b_pad, P), jnp.float32),
        grid=grid,
        in_specs=[
            pl.BlockSpec((block_b, K), lambda i: (i, 0)),   # action indices
            pl.BlockSpec((block_b, H), lambda i: (i, 0)),   # hidden states (f32, cast in-kernel)
            pl.BlockSpec(wb.shape, lambda i: (0, 0)),       # bf16 weight slab (resident)
            pl.BlockSpec(fs.shape, lambda i: (0, 0)),       # f32 bias/aux slab (resident)
        ],
        out_specs=pl.BlockSpec((block_b, P), lambda i: (i, 0)),
        compiler_params=pltpu.CompilerParams(
            dimension_semantics=("parallel",)),
        cost_estimate=pl.CostEstimate(flops=flops, transcendentals=0,
                                      bytes_accessed=bytes_accessed),
    )(act, h_in, wb, fs)

    rewards = out[:B, H:H + K]          # cols [H, H+K) = per-step rewards
    final_hidden = out[:B, :H]          # cols [0, H)   = final hidden state
    return rewards, final_hidden


def dynamics_forward(h, action_idx, packed):
    """Single-step forward == DynamicsModel.forward with a = one_hot(action_idx)."""
    rewards, new_hidden = dynamics_unroll(h, action_idx.reshape(-1, 1), packed)
    return rewards[:, 0], new_hidden


def dynamics_forward_onehot(h, a, packed):
    """Exact PyTorch signature: `a` is a (B, A) one-hot action batch."""
    return dynamics_forward(h, jnp.argmax(a, axis=-1).astype(jnp.int32), packed)


def _reference_forward(h, a, params, hidden_size):
    """Pure-JAX single-step reference with precision matching the kernel."""
    H = hidden_size
    bf, f32 = jnp.bfloat16, jnp.float32

    def mm(lhs, w):
        return jnp.dot(lhs.astype(bf), w.astype(bf), preferred_element_type=f32)

    # first layer: h-part on the MXU in bf16, action contribution exact f32
    z1r = jnp.maximum(mm(h, params["w1r"][:H]) + a @ params["w1r"][H:] + params["b1r"], 0.0)
    reward = z1r @ params["w2r"] + params["b2r"]
    z1h = jnp.maximum(mm(h, params["w1h"][:H]) + a @ params["w1h"][H:] + params["b1h"], 0.0)
    z2 = jnp.maximum(mm(z1h, params["w2h"]) + params["b2h"], 0.0)
    nh = mm(z2, params["w3h"]) + params["b3h"]
    return reward[:, 0], nh


def _reference_unroll(h, act_idx_bk, params, hidden_size):
    A = params["w1r"].shape[0] - hidden_size
    cur, rewards = h, []
    for s in range(act_idx_bk.shape[1]):
        a = jax.nn.one_hot(act_idx_bk[:, s], A, dtype=jnp.float32)
        r, cur = _reference_forward(cur, a, params, hidden_size)
        rewards.append(r)
    return jnp.stack(rewards, axis=1), cur


if __name__ == "__main__":
    ACTIONS = 4
    HIDDEN_SIZE = 32
    BATCH = 256
    UNROLL = 4

    key = jax.random.PRNGKey(0)
    k_params, k_h, k_a = jax.random.split(key, 3)

    params = init_params(k_params, ACTIONS, HIDDEN_SIZE)
    packed = pack_params(params, ACTIONS, HIDDEN_SIZE)

    h = jax.random.normal(k_h, (BATCH, HIDDEN_SIZE), jnp.float32)
    act_steps = jax.random.randint(k_a, (BATCH, UNROLL), 0, ACTIONS).astype(jnp.int32)

    # ---- single-step forward (the PyTorch module's forward) ----
    reward, new_hidden = jax.jit(dynamics_forward)(h, act_steps[:, 0], packed)
    jax.block_until_ready((reward, new_hidden))
    a0 = jax.nn.one_hot(act_steps[:, 0], ACTIONS, dtype=jnp.float32)
    ref_r, ref_h = _reference_forward(h, a0, params, HIDDEN_SIZE)
    assert reward.shape == (BATCH,)
    assert new_hidden.shape == (BATCH, HIDDEN_SIZE)
    assert jnp.allclose(reward, ref_r, atol=1e-2, rtol=1e-2)
    assert jnp.allclose(new_hidden, ref_h, atol=1e-2, rtol=1e-2)

    # ---- one-hot interface (exact PyTorch signature) gives identical results ----
    r_oh, h_oh = jax.jit(dynamics_forward_onehot)(h, a0, packed)
    assert jnp.allclose(r_oh, reward) and jnp.allclose(h_oh, new_hidden)

    # ---- fused K-step unroll (MCTS inner loop) in one pallas_call ----
    rew_k, h_k = jax.jit(dynamics_unroll)(h, act_steps, packed)
    jax.block_until_ready((rew_k, h_k))
    ref_rk, ref_hk = _reference_unroll(h, act_steps, params, HIDDEN_SIZE)
    assert rew_k.shape == (BATCH, UNROLL) and h_k.shape == (BATCH, HIDDEN_SIZE)
    assert jnp.allclose(rew_k, ref_rk, atol=2e-2, rtol=2e-2)
    assert jnp.allclose(h_k, ref_hk, atol=2e-2, rtol=2e-2)

    print("KERNEL_OK")
</pallas_src>

<mosaic_0001>
module attributes {stable_mosaic.version = 11 : i64} {
  func.func @_dynamics_kernel(%arg0: i32, %arg1: memref<256x1xi32, #tpu.memory_space<vmem>>, %arg2: memref<256x32xf32, #tpu.memory_space<vmem>>, %arg3: memref<288x256xbf16, #tpu.memory_space<vmem>>, %arg4: memref<8x256xf32, #tpu.memory_space<vmem>>, %arg5: memref<256x128xf32, #tpu.memory_space<vmem>>) attributes {dimension_semantics = [#tpu.dimension_semantics<parallel>], iteration_bounds = array<i64: 1>, scalar_prefetch = 0 : i64, scratch_operands = 0 : i64, tpu.core_type = #tpu.core_type<tc>, window_params = [{transform_indices = @transform_0, window_bounds = array<i64: 256, 1>}, {transform_indices = @transform_1, window_bounds = array<i64: 256, 32>}, {pipeline_mode = #tpu.pipeline_mode<synchronous>, transform_indices = @transform_2, window_bounds = array<i64: 288, 256>}, {pipeline_mode = #tpu.pipeline_mode<synchronous>, transform_indices = @transform_3, window_bounds = array<i64: 8, 256>}, {transform_indices = @transform_4, window_bounds = array<i64: 256, 128>}]} {
    %c0 = arith.constant 0 : index
    %c0_0 = arith.constant 0 : index
    %0 = vector.load %arg4[%c0, %c0_0] : memref<8x256xf32, #tpu.memory_space<vmem>>, vector<1x256xf32>
    %c1 = arith.constant 1 : index
    %c0_1 = arith.constant 0 : index
    %1 = vector.load %arg4[%c1, %c0_1] : memref<8x256xf32, #tpu.memory_space<vmem>>, vector<1x128xf32>
    %c2 = arith.constant 2 : index
    %c0_2 = arith.constant 0 : index
    %2 = vector.load %arg4[%c2, %c0_2] : memref<8x256xf32, #tpu.memory_space<vmem>>, vector<1x128xf32>
    %c2_3 = arith.constant 2 : index
    %c128 = arith.constant 128 : index
    %3 = vector.load %arg4[%c2_3, %c128] : memref<8x256xf32, #tpu.memory_space<vmem>>, vector<1x1xf32>
    %c3 = arith.constant 3 : index
    %c0_4 = arith.constant 0 : index
    %4 = vector.load %arg4[%c3, %c0_4] : memref<8x256xf32, #tpu.memory_space<vmem>>, vector<1x128xf32>
    %c4 = arith.constant 4 : index
    %c0_5 = arith.constant 0 : index
    %5 = vector.load %arg4[%c4, %c0_5] : memref<8x256xf32, #tpu.memory_space<vmem>>, vector<4x256xf32>
    %c0_6 = arith.constant 0 : index
    %c0_7 = arith.constant 0 : index
    %6 = vector.load %arg3[%c0_6, %c0_7] : memref<288x256xbf16, #tpu.memory_space<vmem>>, vector<128x128xbf16>
    %c128_8 = arith.constant 128 : index
    %c0_9 = arith.constant 0 : index
    %7 = vector.load %arg3[%c128_8, %c0_9] : memref<288x256xbf16, #tpu.memory_space<vmem>>, vector<128x128xbf16>
    %c256 = arith.constant 256 : index
    %c0_10 = arith.constant 0 : index
    %8 = vector.load %arg3[%c256, %c0_10] : memref<288x256xbf16, #tpu.memory_space<vmem>>, vector<32x256xbf16>
    %c0_11 = arith.constant 0 : index
    %c0_12 = arith.constant 0 : index
    %9 = vector.load %arg1[%c0_11, %c0_12] : memref<256x1xi32, #tpu.memory_space<vmem>>, vector<256x1xi32>
    %cst = arith.constant 0.000000e+00 : f32
    %10 = vector.broadcast %cst : f32 to vector<256x256xf32>
    %c0_13 = arith.constant 0 : index
    %c0_14 = arith.constant 0 : index
    %11 = vector.load %arg2[%c0_13, %c0_14] : memref<256x32xf32, #tpu.memory_space<vmem>>, vector<256x32xf32>
    %c0_i32 = arith.constant 0 : i32
    %12 = vector.broadcast %c0_i32 : i32 to vector<256x1xi32>
    %13 = arith.cmpi eq, %9, %12 : vector<256x1xi32>
    %14 = vector.extract_strided_slice %5 {offsets = [0, 0], sizes = [1, 256], strides = [1, 1]} : vector<4x256xf32> to vector<1x256xf32>
    %15 = vector.shape_cast %13 : vector<256x1xi1> to vector<256x1xi1>
    %16 = vector.broadcast %15 : vector<256x1xi1> to vector<256x256xi1>
    %17 = vector.shape_cast %14 : vector<1x256xf32> to vector<1x256xf32>
    %18 = vector.broadcast %17 : vector<1x256xf32> to vector<256x256xf32>
    %19 = arith.select %16, %18, %10 : vector<256x256xi1>, vector<256x256xf32>
    %c1_i32 = arith.constant 1 : i32
    %20 = vector.broadcast %c1_i32 : i32 to vector<256x1xi32>
    %21 = arith.cmpi eq, %9, %20 : vector<256x1xi32>
    %22 = vector.extract_strided_slice %5 {offsets = [1, 0], sizes = [1, 256], strides = [1, 1]} : vector<4x256xf32> to vector<1x256xf32>
    %23 = vector.shape_cast %21 : vector<256x1xi1> to vector<256x1xi1>
    %24 = vector.broadcast %23 : vector<256x1xi1> to vector<256x256xi1>
    %25 = vector.shape_cast %22 : vector<1x256xf32> to vector<1x256xf32>
    %26 = vector.broadcast %25 : vector<1x256xf32> to vector<256x256xf32>
    %27 = arith.select %24, %26, %19 : vector<256x256xi1>, vector<256x256xf32>
    %c2_i32 = arith.constant 2 : i32
    %28 = vector.broadcast %c2_i32 : i32 to vector<256x1xi32>
    %29 = arith.cmpi eq, %9, %28 : vector<256x1xi32>
    %30 = vector.extract_strided_slice %5 {offsets = [2, 0], sizes = [1, 256], strides = [1, 1]} : vector<4x256xf32> to vector<1x256xf32>
    %31 = vector.shape_cast %29 : vector<256x1xi1> to vector<256x1xi1>
    %32 = vector.broadcast %31 : vector<256x1xi1> to vector<256x256xi1>
    %33 = vector.shape_cast %30 : vector<1x256xf32> to vector<1x256xf32>
    %34 = vector.broadcast %33 : vector<1x256xf32> to vector<256x256xf32>
    %35 = arith.select %32, %34, %27 : vector<256x256xi1>, vector<256x256xf32>
    %c3_i32 = arith.constant 3 : i32
    %36 = vector.broadcast %c3_i32 : i32 to vector<256x1xi32>
    %37 = arith.cmpi eq, %9, %36 : vector<256x1xi32>
    %38 = vector.extract_strided_slice %5 {offsets = [3, 0], sizes = [1, 256], strides = [1, 1]} : vector<4x256xf32> to vector<1x256xf32>
    %39 = vector.shape_cast %37 : vector<256x1xi1> to vector<256x1xi1>
    %40 = vector.broadcast %39 : vector<256x1xi1> to vector<256x256xi1>
    %41 = vector.shape_cast %38 : vector<1x256xf32> to vector<1x256xf32>
    %42 = vector.broadcast %41 : vector<1x256xf32> to vector<256x256xf32>
    %43 = arith.select %40, %42, %35 : vector<256x256xi1>, vector<256x256xf32>
    %44 = arith.truncf %11 : vector<256x32xf32> to vector<256x32xbf16>
    %cst_15 = arith.constant dense<0.000000e+00> : vector<256x256xf32>
    %45 = tpu.matmul %44, %8, %cst_15 {dimension_numbers = #tpu.dot_dimension_numbers<[1], [0], [0], [1], [0, 0, 1, 1], [], []>} : vector<256x32xbf16>, vector<32x256xbf16>, vector<256x256xf32> -> vector<256x256xf32>
    %46 = vector.broadcast %0 : vector<1x256xf32> to vector<256x256xf32>
    %47 = arith.addf %45, %46 : vector<256x256xf32>
    %48 = arith.addf %47, %43 : vector<256x256xf32>
    %cst_16 = arith.constant 0.000000e+00 : f32
    %49 = vector.broadcast %cst_16 : f32 to vector<256x256xf32>
    %50 = arith.maximumf %48, %49 : vector<256x256xf32>
    %51 = vector.extract_strided_slice %50 {offsets = [0, 0], sizes = [256, 128], strides = [1, 1]} : vector<256x256xf32> to vector<256x128xf32>
    %52 = vector.broadcast %2 : vector<1x128xf32> to vector<256x128xf32>
    %53 = arith.mulf %51, %52 : vector<256x128xf32>
    %cst_17 = arith.constant dense<0.000000e+00> : vector<256xf32>
    %54 = vector.multi_reduction <add>, %53, %cst_17 [1] : vector<256x128xf32> to vector<256xf32>
    %55 = vector.shape_cast %54 : vector<256xf32> to vector<256x1xf32>
    %56 = vector.broadcast %3 : vector<1x1xf32> to vector<256x1xf32>
    %57 = arith.addf %55, %56 : vector<256x1xf32>
    %58 = vector.extract_strided_slice %50 {offsets = [0, 128], sizes = [256, 128], strides = [1, 1]} : vector<256x256xf32> to vector<256x128xf32>
    %59 = arith.truncf %58 : vector<256x128xf32> to vector<256x128xbf16>
    %cst_18 = arith.constant dense<0.000000e+00> : vector<256x128xf32>
    %60 = tpu.matmul %59, %6, %cst_18 {dimension_numbers = #tpu.dot_dimension_numbers<[1], [0], [0], [1], [0, 0, 1, 1], [], []>} : vector<256x128xbf16>, vector<128x128xbf16>, vector<256x128xf32> -> vector<256x128xf32>
    %61 = vector.broadcast %1 : vector<1x128xf32> to vector<256x128xf32>
    %62 = arith.addf %60, %61 : vector<256x128xf32>
    %cst_19 = arith.constant 0.000000e+00 : f32
    %63 = vector.broadcast %cst_19 : f32 to vector<256x128xf32>
    %64 = arith.maximumf %62, %63 : vector<256x128xf32>
    %65 = arith.truncf %64 : vector<256x128xf32> to vector<256x128xbf16>
    %cst_20 = arith.constant dense<0.000000e+00> : vector<256x128xf32>
    %66 = tpu.matmul %65, %7, %cst_20 {dimension_numbers = #tpu.dot_dimension_numbers<[1], [0], [0], [1], [0, 0, 1, 1], [], []>} : vector<256x128xbf16>, vector<128x128xbf16>, vector<256x128xf32> -> vector<256x128xf32>
    %67 = vector.broadcast %4 : vector<1x128xf32> to vector<256x128xf32>
    %68 = arith.addf %66, %67 : vector<256x128xf32>
    %69 = tpu.iota {dimensions = array<i32: 1>} : vector<256x128xi32>
    %c32_i32 = arith.constant 32 : i32
    %70 = vector.broadcast %c32_i32 : i32 to vector<256x128xi32>
    %71 = arith.cmpi eq, %69, %70 : vector<256x128xi32>
    %72 = vector.shape_cast %57 : vector<256x1xf32> to vector<256x1xf32>
    %73 = vector.broadcast %72 : vector<256x1xf32> to vector<256x128xf32>
    %74 = arith.select %71, %73, %68 : vector<256x128xi1>, vector<256x128xf32>
    %c0_21 = arith.constant 0 : index
    %c0_22 = arith.constant 0 : index
    %75 = vector.load %arg5[%c0_21, %c0_22] : memref<256x128xf32, #tpu.memory_space<vmem>>, vector<256x128xf32>
    tpu.vector_store %arg5[%c0_21, %c0_22], %74 {strides = array<i32>} : memref<256x128xf32, #tpu.memory_space<vmem>>, vector<256x128xf32>,
    return
  }
  func.func @transform_0(%arg0: i32) -> (i32, i32) {
    %c0_i32 = arith.constant 0 : i32
    %c0_i32_0 = arith.constant 0 : i32
    return %arg0, %c0_i32 : i32, i32
  }
  func.func @transform_1(%arg0: i32) -> (i32, i32) {
    %c0_i32 = arith.constant 0 : i32
    %c0_i32_0 = arith.constant 0 : i32
    return %arg0, %c0_i32 : i32, i32
  }
  func.func @transform_2(%arg0: i32) -> (i32, i32) {
    %c0_i32 = arith.constant 0 : i32
    %c0_i32_0 = arith.constant 0 : i32
    %c0_i32_1 = arith.constant 0 : i32
    return %c0_i32, %c0_i32_0 : i32, i32
  }
  func.func @transform_3(%arg0: i32) -> (i32, i32) {
    %c0_i32 = arith.constant 0 : i32
    %c0_i32_0 = arith.constant 0 : i32
    %c0_i32_1 = arith.constant 0 : i32
    return %c0_i32, %c0_i32_0 : i32, i32
  }
  func.func @transform_4(%arg0: i32) -> (i32, i32) {
    %c0_i32 = arith.constant 0 : i32
    %c0_i32_0 = arith.constant 0 : i32
    return %arg0, %c0_i32 : i32, i32
  }
}

</mosaic_0001>

<llo_original>
// kernel: dynamics_forward.1
$region0: #{dynamics_forward.1}
  #allocation0 [shape = 'u32[]', space=smem, size = 0x4, offset = 0x4, fixed_abs, tag = 'smem constant byte address 0x4 - core index']
  #allocation1 [shape = 'u32[144,128]{1,0:T(1,128)}', space=vmem, size = 0x12000, scoped, tag = 'internal scratch']
  %s0 = inlined_call_operand.vmem [shape: s32[256,1], index: 0, kind: input, shape index: {}]
  %s1 = inlined_call_operand.vmem [shape: f32[256,32], index: 1, kind: input, shape index: {}]
  %s2 = inlined_call_operand.vmem [shape: bf16[288,256], index: 2, kind: input, shape index: {}]
  %s3 = inlined_call_operand.vmem [shape: f32[8,256], index: 3, kind: input, shape index: {}]
  %s4 = inlined_call_operand.vmem [shape: f32[256,128], index: 4, kind: output, shape index: {}]
  %s5 = sld [smem:[#allocation0]]
  $region26: #{dynamics_forward.1} parent=0
    _
  %s7 = ssub.s32 1, %s5
  %s8 = scalar_select 0, %s7, %s5
  // Predicated region
  $region2: #{dynamics_forward.1} parent=0 // pred_check
    _
  $region3: #{dynamics_forward.1} parent=0 // pred_check_branch
    %10 = sbr.rel (0) target = $region5
  $region4: #{dynamics_forward.1} parent=0 // pred_region
    _
  $region5: #{dynamics_forward.1} parent=0 // pred_fallthru
    _
  // Predicated region
  $region6: #{dynamics_forward.1} parent=0 // pred_check
    _
  $region7: #{dynamics_forward.1} parent=0 // pred_check_branch
    %12 = sbr.rel (0) target = $region9
  $region8: #{dynamics_forward.1} parent=0 // pred_region
    _
  $region9: #{dynamics_forward.1} parent=0 // pred_fallthru
    _
  // Predicated region
  $region10: #{dynamics_forward.1} parent=0 // pred_check
    _
  $region11: #{dynamics_forward.1} parent=0 // pred_check_branch
    %14 = sbr.rel (0) target = $region13
  $region12: #{dynamics_forward.1} parent=0 // pred_region
    _
  $region13: #{dynamics_forward.1} parent=0 // pred_fallthru
    _
  // Predicated region
  $region14: #{dynamics_forward.1} parent=0 // pred_check
    _
  $region15: #{dynamics_forward.1} parent=0 // pred_check_branch
    %16 = sbr.rel (0) target = $region17
  $region16: #{dynamics_forward.1} parent=0 // pred_region
    _
  $region17: #{dynamics_forward.1} parent=0 // pred_fallthru
    _
  %v18 = vld [vmem:[%s3] ss:$8 sm:$0x3]
  %v19 = vld [vmem:[%s3 + $0x1] ss:$0 sm:$0xff]
  %v20 = vld [vmem:[%s3 + $0x2] ss:$0 sm:$0xff]
  %v21 = vld [vmem:[%s3 + $0xa] ss:$0 sm:$0xff]
  %v22 = vld [vmem:[%s3 + $0x3] ss:$0 sm:$0xff]
  %v23 = vld [vmem:[%s3] sm:$0xf0]
  %v24 = vld [vmem:[%s3 + $0x8] sm:$0xf0]
  %v25 = vld [vmem:[%s2] sm:$0xf]
  %v26 = vld [vmem:[%s2 + $0x8] sm:$0xf]
  %v27 = vld [vmem:[%s2 + $0x10] sm:$0xf]
  %v28 = vld [vmem:[%s2 + $0x18] sm:$0xf]
  %v29 = vld [vmem:[%s2 + $0x20] sm:$0xf]
  %v30 = vld [vmem:[%s2 + $0x28] sm:$0xf]
  %v31 = vld [vmem:[%s2 + $0x30] sm:$0xf]
  %v32 = vld [vmem:[%s2 + $0x38] sm:$0xf]
  %v33 = vld [vmem:[%s2 + $0x40] sm:$0xf]
  %v34 = vld [vmem:[%s2 + $0x48] sm:$0xf]
  %v35 = vld [vmem:[%s2 + $0x50] sm:$0xf]
  %v36 = vld [vmem:[%s2 + $0x58] sm:$0xf]
  %v37 = vld [vmem:[%s2 + $0x60] sm:$0xf]
  %v38 = vld [vmem:[%s2 + $0x68] sm:$0xf]
  %v39 = vld [vmem:[%s2 + $0x70] sm:$0xf]
  %v40 = vld [vmem:[%s2 + $0x78] sm:$0xf]
  %v41 = vld [vmem:[%s2 + $0x80] sm:$0xf]
  %v42 = vld [vmem:[%s2 + $0x88] sm:$0xf]
  %v43 = vld [vmem:[%s2 + $0x90] sm:$0xf]
  %v44 = vld [vmem:[%s2 + $0x98] sm:$0xf]
  %v45 = vld [vmem:[%s2 + $0xa0] sm:$0xf]
  %v46 = vld [vmem:[%s2 + $0xa8] sm:$0xf]
  %v47 = vld [vmem:[%s2 + $0xb0] sm:$0xf]
  %v48 = vld [vmem:[%s2 + $0xb8] sm:$0xf]
  %v49 = vld [vmem:[%s2 + $0xc0] sm:$0xf]
  %v50 = vld [vmem:[%s2 + $0xc8] sm:$0xf]
  %v51 = vld [vmem:[%s2 + $0xd0] sm:$0xf]
  %v52 = vld [vmem:[%s2 + $0xd8] sm:$0xf]
  %v53 = vld [vmem:[%s2 + $0xe0] sm:$0xf]
  %v54 = vld [vmem:[%s2 + $0xe8] sm:$0xf]
  %v55 = vld [vmem:[%s2 + $0xf0] sm:$0xf]
  %v56 = vld [vmem:[%s2 + $0xf8] sm:$0xf]
  %v57 = vld [vmem:[%s2 + $0x100] sm:$0xff]
  %v58 = vld [vmem:[%s2 + $0x108] sm:$0xff]
  %v59 = vld [vmem:[%s2 + $0x110] sm:$0xff]
  %v60 = vld [vmem:[%s2 + $0x118] sm:$0xff]
  %v61 = vld [vmem:[%s0] sm:$0xff]
  %v62 = vld [vmem:[%s0 + $0x8] sm:$0xff]
  %v63 = vld [vmem:[%s0 + $0x10] sm:$0xff]
  %v64 = vld [vmem:[%s0 + $0x18] sm:$0xff]
  %v65 = vld [vmem:[%s0 + $0x20] sm:$0xff]
  %v66 = vld [vmem:[%s0 + $0x28] sm:$0xff]
  %v67 = vld [vmem:[%s0 + $0x30] sm:$0xff]
  %v68 = vld [vmem:[%s0 + $0x38] sm:$0xff]
  %v69 = vld [vmem:[%s0 + $0x40] sm:$0xff]
  %v70 = vld [vmem:[%s0 + $0x48] sm:$0xff]
  %v71 = vld [vmem:[%s0 + $0x50] sm:$0xff]
  %v72 = vld [vmem:[%s0 + $0x58] sm:$0xff]
  %v73 = vld [vmem:[%s0 + $0x60] sm:$0xff]
  %v74 = vld [vmem:[%s0 + $0x68] sm:$0xff]
  %v75 = vld [vmem:[%s0 + $0x70] sm:$0xff]
  %v76 = vld [vmem:[%s0 + $0x78] sm:$0xff]
  %v77 = vld [vmem:[%s0 + $0x80] sm:$0xff]
  %v78 = vld [vmem:[%s0 + $0x88] sm:$0xff]
  %v79 = vld [vmem:[%s0 + $0x90] sm:$0xff]
  %v80 = vld [vmem:[%s0 + $0x98] sm:$0xff]
  %v81 = vld [vmem:[%s0 + $0xa0] sm:$0xff]
  %v82 = vld [vmem:[%s0 + $0xa8] sm:$0xff]
  %v83 = vld [vmem:[%s0 + $0xb0] sm:$0xff]
  %v84 = vld [vmem:[%s0 + $0xb8] sm:$0xff]
  %v85 = vld [vmem:[%s0 + $0xc0] sm:$0xff]
  %v86 = vld [vmem:[%s0 + $0xc8] sm:$0xff]
  %v87 = vld [vmem:[%s0 + $0xd0] sm:$0xff]
  %v88 = vld [vmem:[%s0 + $0xd8] sm:$0xff]
  %v89 = vld [vmem:[%s0 + $0xe0] sm:$0xff]
  %v90 = vld [vmem:[%s0 + $0xe8] sm:$0xff]
  %v91 = vld [vmem:[%s0 + $0xf0] sm:$0xff]
  %v92 = vld [vmem:[%s0 + $0xf8] sm:$0xff]
  %v93 = vld [vmem:[%s1] sm:$0xff]
  %v94 = vld [vmem:[%s1 + $0x8] sm:$0xff]
  %v95 = vld [vmem:[%s1 + $0x10] sm:$0xff]
  %v96 = vld [vmem:[%s1 + $0x18] sm:$0xff]
  %v97 = vld [vmem:[%s1 + $0x20] sm:$0xff]
  %v98 = vld [vmem:[%s1 + $0x28] sm:$0xff]
  %v99 = vld [vmem:[%s1 + $0x30] sm:$0xff]
  %v100 = vld [vmem:[%s1 + $0x38] sm:$0xff]
  %v101 = vld [vmem:[%s1 + $0x40] sm:$0xff]
  %v102 = vld [vmem:[%s1 + $0x48] sm:$0xff]
  %v103 = vld [vmem:[%s1 + $0x50] sm:$0xff]
  %v104 = vld [vmem:[%s1 + $0x58] sm:$0xff]
  %v105 = vld [vmem:[%s1 + $0x60] sm:$0xff]
  %v106 = vld [vmem:[%s1 + $0x68] sm:$0xff]
  %v107 = vld [vmem:[%s1 + $0x70] sm:$0xff]
  %v108 = vld [vmem:[%s1 + $0x78] sm:$0xff]
  %v109 = vld [vmem:[%s1 + $0x80] sm:$0xff]
  %v110 = vld [vmem:[%s1 + $0x88] sm:$0xff]
  %v111 = vld [vmem:[%s1 + $0x90] sm:$0xff]
  %v112 = vld [vmem:[%s1 + $0x98] sm:$0xff]
  %v113 = vld [vmem:[%s1 + $0xa0] sm:$0xff]
  %v114 = vld [vmem:[%s1 + $0xa8] sm:$0xff]
  %v115 = vld [vmem:[%s1 + $0xb0] sm:$0xff]
  %v116 = vld [vmem:[%s1 + $0xb8] sm:$0xff]
  %v117 = vld [vmem:[%s1 + $0xc0] sm:$0xff]
  %v118 = vld [vmem:[%s1 + $0xc8] sm:$0xff]
  %v119 = vld [vmem:[%s1 + $0xd0] sm:$0xff]
  %v120 = vld [vmem:[%s1 + $0xd8] sm:$0xff]
  %v121 = vld [vmem:[%s1 + $0xe0] sm:$0xff]
  %v122 = vld [vmem:[%s1 + $0xe8] sm:$0xff]
  %v123 = vld [vmem:[%s1 + $0xf0] sm:$0xff]
  %v124 = vld [vmem:[%s1 + $0xf8] sm:$0xff]
  %vm125 = vcmp.eq.s32.totalorder %v61, 0
  %vm126 = vcmp.eq.s32.totalorder %v62, 0
  %vm127 = vcmp.eq.s32.totalorder %v63, 0
  %vm128 = vcmp.eq.s32.totalorder %v64, 0
  %vm129 = vcmp.eq.s32.totalorder %v65, 0
  %vm130 = vcmp.eq.s32.totalorder %v66, 0
  %vm131 = vcmp.eq.s32.totalorder %v67, 0
  %vm132 = vcmp.eq.s32.totalorder %v68, 0
  %vm133 = vcmp.eq.s32.totalorder %v69, 0
  %vm134 = vcmp.eq.s32.totalorder %v70, 0
  %vm135 = vcmp.eq.s32.totalorder %v71, 0
  %vm136 = vcmp.eq.s32.totalorder %v72, 0
  %vm137 = vcmp.eq.s32.totalorder %v73, 0
  %vm138 = vcmp.eq.s32.totalorder %v74, 0
  %vm139 = vcmp.eq.s32.totalorder %v75, 0
  %vm140 = vcmp.eq.s32.totalorder %v76, 0
  %vm141 = vcmp.eq.s32.totalorder %v77, 0
  %vm142 = vcmp.eq.s32.totalorder %v78, 0
  %vm143 = vcmp.eq.s32.totalorder %v79, 0
  %vm144 = vcmp.eq.s32.totalorder %v80, 0
  %vm145 = vcmp.eq.s32.totalorder %v81, 0
  %vm146 = vcmp.eq.s32.totalorder %v82, 0
  %vm147 = vcmp.eq.s32.totalorder %v83, 0
  %vm148 = vcmp.eq.s32.totalorder %v84, 0
  %vm149 = vcmp.eq.s32.totalorder %v85, 0
  %vm150 = vcmp.eq.s32.totalorder %v86, 0
  %vm151 = vcmp.eq.s32.totalorder %v87, 0
  %vm152 = vcmp.eq.s32.totalorder %v88, 0
  %vm153 = vcmp.eq.s32.totalorder %v89, 0
  %vm154 = vcmp.eq.s32.totalorder %v90, 0
  %vm155 = vcmp.eq.s32.totalorder %v91, 0
  %vm156 = vcmp.eq.s32.totalorder %v92, 0
  %v157 = vsel %vm125, 1, 0
  %v158 = vsel %vm126, 1, 0
  %v159 = vsel %vm127, 1, 0
  %v160 = vsel %vm128, 1, 0
  %v161 = vsel %vm129, 1, 0
  %v162 = vsel %vm130, 1, 0
  %v163 = vsel %vm131, 1, 0
  %v164 = vsel %vm132, 1, 0
  %v165 = vsel %vm133, 1, 0
  %v166 = vsel %vm134, 1, 0
  %v167 = vsel %vm135, 1, 0
  %v168 = vsel %vm136, 1, 0
  %v169 = vsel %vm137, 1, 0
  %v170 = vsel %vm138, 1, 0
  %v171 = vsel %vm139, 1, 0
  %v172 = vsel %vm140, 1, 0
  %v173 = vsel %vm141, 1, 0
  %v174 = vsel %vm142, 1, 0
  %v175 = vsel %vm143, 1, 0
  %v176 = vsel %vm144, 1, 0
  %v177 = vsel %vm145, 1, 0
  %v178 = vsel %vm146, 1, 0
  %v179 = vsel %vm147, 1, 0
  %v180 = vsel %vm148, 1, 0
  %v181 = vsel %vm149, 1, 0
  %v182 = vsel %vm150, 1, 0
  %v183 = vsel %vm151, 1, 0
  %v184 = vsel %vm152, 1, 0
  %v185 = vsel %vm153, 1, 0
  %v186 = vsel %vm154, 1, 0
  %v187 = vsel %vm155, 1, 0
  %v188 = vsel %vm156, 1, 0
  %189 = vset.pattern.permute.xlu0 0
  %190 = vperm.xlu0 %189, %v157
  %v191 = vpop.permute.xlu0 %190
  %192 = vset.pattern.permute.xlu0 0
  %193 = vperm.xlu0 %192, %v158
  %v194 = vpop.permute.xlu0 %193
  %195 = vset.pattern.permute.xlu0 0
  %196 = vperm.xlu0 %195, %v159
  %v197 = vpop.permute.xlu0 %196
  %198 = vset.pattern.permute.xlu0 0
  %199 = vperm.xlu0 %198, %v160
  %v200 = vpop.permute.xlu0 %199
  %201 = vset.pattern.permute.xlu0 0
  %202 = vperm.xlu0 %201, %v161
  %v203 = vpop.permute.xlu0 %202
  %204 = vset.pattern.permute.xlu0 0
  %205 = vperm.xlu0 %204, %v162
  %v206 = vpop.permute.xlu0 %205
  %207 = vset.pattern.permute.xlu0 0
  %208 = vperm.xlu0 %207, %v163
  %v209 = vpop.permute.xlu0 %208
  %210 = vset.pattern.permute.xlu0 0
  %211 = vperm.xlu0 %210, %v164
  %v212 = vpop.permute.xlu0 %211
  %213 = vset.pattern.permute.xlu0 0
  %214 = vperm.xlu0 %213, %v165
  %v215 = vpop.permute.xlu0 %214
  %216 = vset.pattern.permute.xlu0 0
  %217 = vperm.xlu0 %216, %v166
  %v218 = vpop.permute.xlu0 %217
  %219 = vset.pattern.permute.xlu0 0
  %220 = vperm.xlu0 %219, %v167
  %v221 = vpop.permute.xlu0 %220
  %222 = vset.pattern.permute.xlu0 0
  %223 = vperm.xlu0 %222, %v168
  %v224 = vpop.permute.xlu0 %223
  %225 = vset.pattern.permute.xlu0 0
  %226 = vperm.xlu0 %225, %v169
  %v227 = vpop.permute.xlu0 %226
  %228 = vset.pattern.permute.xlu0 0
  %229 = vperm.xlu0 %228, %v170
  %v230 = vpop.permute.xlu0 %229
  %231 = vset.pattern.permute.xlu0 0
  %232 = vperm.xlu0 %231, %v171
  %v233 = vpop.permute.xlu0 %232
  %234 = vset.pattern.permute.xlu0 0
  %235 = vperm.xlu0 %234, %v172
  %v236 = vpop.permute.xlu0 %235
  %237 = vset.pattern.permute.xlu0 0
  %238 = vperm.xlu0 %237, %v173
  %v239 = vpop.permute.xlu0 %238
  %240 = vset.pattern.permute.xlu0 0
  %241 = vperm.xlu0 %240, %v174
  %v242 = vpop.permute.xlu0 %241
  %243 = vset.pattern.permute.xlu0 0
  %244 = vperm.xlu0 %243, %v175
  %v245 = vpop.permute.xlu0 %244
  %246 = vset.pattern.permute.xlu0 0
  %247 = vperm.xlu0 %246, %v176
  %v248 = vpop.permute.xlu0 %247
  %249 = vset.pattern.permute.xlu0 0
  %250 = vperm.xlu0 %249, %v177
  %v251 = vpop.permute.xlu0 %250
  %252 = vset.pattern.permute.xlu0 0
  %253 = vperm.xlu0 %252, %v178
  %v254 = vpop.permute.xlu0 %253
  %255 = vset.pattern.permute.xlu0 0
  %256 = vperm.xlu0 %255, %v179
  %v257 = vpop.permute.xlu0 %256
  %258 = vset.pattern.permute.xlu0 0
  %259 = vperm.xlu0 %258, %v180
  %v260 = vpop.permute.xlu0 %259
  %261 = vset.pattern.permute.xlu0 0
  %262 = vperm.xlu0 %261, %v181
  %v263 = vpop.permute.xlu0 %262
  %264 = vset.pattern.permute.xlu0 0
  %265 = vperm.xlu0 %264, %v182
  %v266 = vpop.permute.xlu0 %265
  %267 = vset.pattern.permute.xlu0 0
  %268 = vperm.xlu0 %267, %v183
  %v269 = vpop.permute.xlu0 %268
  %270 = vset.pattern.permute.xlu0 0
  %271 = vperm.xlu0 %270, %v184
  %v272 = vpop.permute.xlu0 %271
  %273 = vset.pattern.permute.xlu0 0
  %274 = vperm.xlu0 %273, %v185
  %v275 = vpop.permute.xlu0 %274
  %276 = vset.pattern.permute.xlu0 0
  %277 = vperm.xlu0 %276, %v186
  %v278 = vpop.permute.xlu0 %277
  %279 = vset.pattern.permute.xlu0 0
  %280 = vperm.xlu0 %279, %v187
  %v281 = vpop.permute.xlu0 %280
  %282 = vset.pattern.permute.xlu0 0
  %283 = vperm.xlu0 %282, %v188
  %v284 = vpop.permute.xlu0 %283
  %vm285 = vcmp.eq.s32.totalorder %v191, 1
  %vm286 = vcmp.eq.s32.totalorder %v194, 1
  %vm287 = vcmp.eq.s32.totalorder %v197, 1
  %vm288 = vcmp.eq.s32.totalorder %v200, 1
  %vm289 = vcmp.eq.s32.totalorder %v203, 1
  %vm290 = vcmp.eq.s32.totalorder %v206, 1
  %vm291 = vcmp.eq.s32.totalorder %v209, 1
  %vm292 = vcmp.eq.s32.totalorder %v212, 1
  %vm293 = vcmp.eq.s32.totalorder %v215, 1
  %vm294 = vcmp.eq.s32.totalorder %v218, 1
  %vm295 = vcmp.eq.s32.totalorder %v221, 1
  %vm296 = vcmp.eq.s32.totalorder %v224, 1
  %vm297 = vcmp.eq.s32.totalorder %v227, 1
  %vm298 = vcmp.eq.s32.totalorder %v230, 1
  %vm299 = vcmp.eq.s32.totalorder %v233, 1
  %vm300 = vcmp.eq.s32.totalorder %v236, 1
  %vm301 = vcmp.eq.s32.totalorder %v239, 1
  %vm302 = vcmp.eq.s32.totalorder %v242, 1
  %vm303 = vcmp.eq.s32.totalorder %v245, 1
  %vm304 = vcmp.eq.s32.totalorder %v248, 1
  %vm305 = vcmp.eq.s32.totalorder %v251, 1
  %vm306 = vcmp.eq.s32.totalorder %v254, 1
  %vm307 = vcmp.eq.s32.totalorder %v257, 1
  %vm308 = vcmp.eq.s32.totalorder %v260, 1
  %vm309 = vcmp.eq.s32.totalorder %v263, 1
  %vm310 = vcmp.eq.s32.totalorder %v266, 1
  %vm311 = vcmp.eq.s32.totalorder %v269, 1
  %vm312 = vcmp.eq.s32.totalorder %v272, 1
  %vm313 = vcmp.eq.s32.totalorder %v275, 1
  %vm314 = vcmp.eq.s32.totalorder %v278, 1
  %vm315 = vcmp.eq.s32.totalorder %v281, 1
  %vm316 = vcmp.eq.s32.totalorder %v284, 1
  %v317 = vlaneseq
  %v318 = vshrl.u32 %v317, 7
  %v319 = vsub.s32 4, %v318
  %v320 = vrot.slane %v23, %v319
  %v321 = vlaneseq
  %v322 = vshrl.u32 %v321, 7
  %v323 = vsub.s32 4, %v322
  %v324 = vrot.slane %v24, %v323
  %v325 = vsel %vm285, %v320, 0.0
  %v326 = vsel %vm285, %v324, 0.0
  %v327 = vsel %vm286, %v320, 0.0
  %v328 = vsel %vm286, %v324, 0.0
  %v329 = vsel %vm287, %v320, 0.0
  %v330 = vsel %vm287, %v324, 0.0
  %v331 = vsel %vm288, %v320, 0.0
  %v332 = vsel %vm288, %v324, 0.0
  %v333 = vsel %vm289, %v320, 0.0
  %v334 = vsel %vm289, %v324, 0.0
  %v335 = vsel %vm290, %v320, 0.0
  %v336 = vsel %vm290, %v324, 0.0
  %v337 = vsel %vm291, %v320, 0.0
  %v338 = vsel %vm291, %v324, 0.0
  %v339 = vsel %vm292, %v320, 0.0
  %v340 = vsel %vm292, %v324, 0.0
  %v341 = vsel %vm293, %v320, 0.0
  %v342 = vsel %vm293, %v324, 0.0
  %v343 = vsel %vm294, %v320, 0.0
  %v344 = vsel %vm294, %v324, 0.0
  %v345 = vsel %vm295, %v320, 0.0
  %v346 = vsel %vm295, %v324, 0.0
  %v347 = vsel %vm296, %v320, 0.0
  %v348 = vsel %vm296, %v324, 0.0
  %v349 = vsel %vm297, %v320, 0.0
  %v350 = vsel %vm297, %v324, 0.0
  %v351 = vsel %vm298, %v320, 0.0
  %v352 = vsel %vm298, %v324, 0.0
  %v353 = vsel %vm299, %v320, 0.0
  %v354 = vsel %vm299, %v324, 0.0
  %v355 = vsel %vm300, %v320, 0.0
  %v356 = vsel %vm300, %v324, 0.0
  %v357 = vsel %vm301, %v320, 0.0
  %v358 = vsel %vm301, %v324, 0.0
  %v359 = vsel %vm302, %v320, 0.0
  %v360 = vsel %vm302, %v324, 0.0
  %v361 = vsel %vm303, %v320, 0.0
  %v362 = vsel %vm303, %v324, 0.0
  %v363 = vsel %vm304, %v320, 0.0
  %v364 = vsel %vm304, %v324, 0.0
  %v365 = vsel %vm305, %v320, 0.0
  %v366 = vsel %vm305, %v324, 0.0
  %v367 = vsel %vm306, %v320, 0.0
  %v368 = vsel %vm306, %v324, 0.0
  %v369 = vsel %vm307, %v320, 0.0
  %v370 = vsel %vm307, %v324, 0.0
  %v371 = vsel %vm308, %v320, 0.0
  %v372 = vsel %vm308, %v324, 0.0
  %v373 = vsel %vm309, %v320, 0.0
  %v374 = vsel %vm309, %v324, 0.0
  %v375 = vsel %vm310, %v320, 0.0
  %v376 = vsel %vm310, %v324, 0.0
  %v377 = vsel %vm311, %v320, 0.0
  %v378 = vsel %vm311, %v324, 0.0
  %v379 = vsel %vm312, %v320, 0.0
  %v380 = vsel %vm312, %v324, 0.0
  %v381 = vsel %vm313, %v320, 0.0
  %v382 = vsel %vm313, %v324, 0.0
  %v383 = vsel %vm314, %v320, 0.0
  %v384 = vsel %vm314, %v324, 0.0
  %v385 = vsel %vm315, %v320, 0.0
  %v386 = vsel %vm315, %v324, 0.0
  %v387 = vsel %vm316, %v320, 0.0
  %v388 = vsel %vm316, %v324, 0.0
  %vm389 = vcmp.eq.s32.totalorder %v61, 1
  %vm390 = vcmp.eq.s32.totalorder %v62, 1
  %vm391 = vcmp.eq.s32.totalorder %v63, 1
  %vm392 = vcmp.eq.s32.totalorder %v64, 1
  %vm393 = vcmp.eq.s32.totalorder %v65, 1
  %vm394 = vcmp.eq.s32.totalorder %v66, 1
  %vm395 = vcmp.eq.s32.totalorder %v67, 1
  %vm396 = vcmp.eq.s32.totalorder %v68, 1
  %vm397 = vcmp.eq.s32.totalorder %v69, 1
  %vm398 = vcmp.eq.s32.totalorder %v70, 1
  %vm399 = vcmp.eq.s32.totalorder %v71, 1
  %vm400 = vcmp.eq.s32.totalorder %v72, 1
  %vm401 = vcmp.eq.s32.totalorder %v73, 1
  %vm402 = vcmp.eq.s32.totalorder %v74, 1
  %vm403 = vcmp.eq.s32.totalorder %v75, 1
  %vm404 = vcmp.eq.s32.totalorder %v76, 1
  %vm405 = vcmp.eq.s32.totalorder %v77, 1
  %vm406 = vcmp.eq.s32.totalorder %v78, 1
  %vm407 = vcmp.eq.s32.totalorder %v79, 1
  %vm408 = vcmp.eq.s32.totalorder %v80, 1
  %vm409 = vcmp.eq.s32.totalorder %v81, 1
  %vm410 = vcmp.eq.s32.totalorder %v82, 1
  %vm411 = vcmp.eq.s32.totalorder %v83, 1
  %vm412 = vcmp.eq.s32.totalorder %v84, 1
  %vm413 = vcmp.eq.s32.totalorder %v85, 1
  %vm414 = vcmp.eq.s32.totalorder %v86, 1
  %vm415 = vcmp.eq.s32.totalorder %v87, 1
  %vm416 = vcmp.eq.s32.totalorder %v88, 1
  %vm417 = vcmp.eq.s32.totalorder %v89, 1
  %vm418 = vcmp.eq.s32.totalorder %v90, 1
  %vm419 = vcmp.eq.s32.totalorder %v91, 1
  %vm420 = vcmp.eq.s32.totalorder %v92, 1
  %v421 = vsel %vm389, 1, 0
  %v422 = vsel %vm390, 1, 0
  %v423 = vsel %vm391, 1, 0
  %v424 = vsel %vm392, 1, 0
  %v425 = vsel %vm393, 1, 0
  %v426 = vsel %vm394, 1, 0
  %v427 = vsel %vm395, 1, 0
  %v428 = vsel %vm396, 1, 0
  %v429 = vsel %vm397, 1, 0
  %v430 = vsel %vm398, 1, 0
  %v431 = vsel %vm399, 1, 0
  %v432 = vsel %vm400, 1, 0
  %v433 = vsel %vm401, 1, 0
  %v434 = vsel %vm402, 1, 0
  %v435 = vsel %vm403, 1, 0
  %v436 = vsel %vm404, 1, 0
  %v437 = vsel %vm405, 1, 0
  %v438 = vsel %vm406, 1, 0
  %v439 = vsel %vm407, 1, 0
  %v440 = vsel %vm408, 1, 0
  %v441 = vsel %vm409, 1, 0
  %v442 = vsel %vm410, 1, 0
  %v443 = vsel %vm411, 1, 0
  %v444 = vsel %vm412, 1, 0
  %v445 = vsel %vm413, 1, 0
  %v446 = vsel %vm414, 1, 0
  %v447 = vsel %vm415, 1, 0
  %v448 = vsel %vm416, 1, 0
  %v449 = vsel %vm417, 1, 0
  %v450 = vsel %vm418, 1, 0
  %v451 = vsel %vm419, 1, 0
  %v452 = vsel %vm420, 1, 0
  %453 = vset.pattern.permute.xlu0 0
  %454 = vperm.xlu0 %453, %v421
  %v455 = vpop.permute.xlu0 %454
  %456 = vset.pattern.permute.xlu0 0
  %457 = vperm.xlu0 %456, %v422
  %v458 = vpop.permute.xlu0 %457
  %459 = vset.pattern.permute.xlu0 0
  %460 = vperm.xlu0 %459, %v423
  %v461 = vpop.permute.xlu0 %460
  %462 = vset.pattern.permute.xlu0 0
  %463 = vperm.xlu0 %462, %v424
  %v464 = vpop.permute.xlu0 %463
  %465 = vset.pattern.permute.xlu0 0
  %466 = vperm.xlu0 %465, %v425
  %v467 = vpop.permute.xlu0 %466
  %468 = vset.pattern.permute.xlu0 0
  %469 = vperm.xlu0 %468, %v426
  %v470 = vpop.permute.xlu0 %469
  %471 = vset.pattern.permute.xlu0 0
  %472 = vperm.xlu0 %471, %v427
  %v473 = vpop.permute.xlu0 %472
  %474 = vset.pattern.permute.xlu0 0
  %475 = vperm.xlu0 %474, %v428
  %v476 = vpop.permute.xlu0 %475
  %477 = vset.pattern.permute.xlu0 0
  %478 = vperm.xlu0 %477, %v429
  %v479 = vpop.permute.xlu0 %478
  %480 = vset.pattern.permute.xlu0 0
  %481 = vperm.xlu0 %480, %v430
  %v482 = vpop.permute.xlu0 %481
  %483 = vset.pattern.permute.xlu0 0
  %484 = vperm.xlu0 %483, %v431
  %v485 = vpop.permute.xlu0 %484
  %486 = vset.pattern.permute.xlu0 0
  %487 = vperm.xlu0 %486, %v432
  %v488 = vpop.permute.xlu0 %487
  %489 = vset.pattern.permute.xlu0 0
  %490 = vperm.xlu0 %489, %v433
  %v491 = vpop.permute.xlu0 %490
  %492 = vset.pattern.permute.xlu0 0
  %493 = vperm.xlu0 %492, %v434
  %v494 = vpop.permute.xlu0 %493
  %495 = vset.pattern.permute.xlu0 0
  %496 = vperm.xlu0 %495, %v435
  %v497 = vpop.permute.xlu0 %496
  %498 = vset.pattern.permute.xlu0 0
  %499 = vperm.xlu0 %498, %v436
  %v500 = vpop.permute.xlu0 %499
  %501 = vset.pattern.permute.xlu0 0
  %502 = vperm.xlu0 %501, %v437
  %v503 = vpop.permute.xlu0 %502
  %504 = vset.pattern.permute.xlu0 0
  %505 = vperm.xlu0 %504, %v438
  %v506 = vpop.permute.xlu0 %505
  %507 = vset.pattern.permute.xlu0 0
  %508 = vperm.xlu0 %507, %v439
  %v509 = vpop.permute.xlu0 %508
  %510 = vset.pattern.permute.xlu0 0
  %511 = vperm.xlu0 %510, %v440
  %v512 = vpop.permute.xlu0 %511
  %513 = vset.pattern.permute.xlu0 0
  %514 = vperm.xlu0 %513, %v441
  %v515 = vpop.permute.xlu0 %514
  %516 = vset.pattern.permute.xlu0 0
  %517 = vperm.xlu0 %516, %v442
  %v518 = vpop.permute.xlu0 %517
  %519 = vset.pattern.permute.xlu0 0
  %520 = vperm.xlu0 %519, %v443
  %v521 = vpop.permute.xlu0 %520
  %522 = vset.pattern.permute.xlu0 0
  %523 = vperm.xlu0 %522, %v444
  %v524 = vpop.permute.xlu0 %523
  %525 = vset.pattern.permute.xlu0 0
  %526 = vperm.xlu0 %525, %v445
  %v527 = vpop.permute.xlu0 %526
  %528 = vset.pattern.permute.xlu0 0
  %529 = vperm.xlu0 %528, %v446
  %v530 = vpop.permute.xlu0 %529
  %531 = vset.pattern.permute.xlu0 0
  %532 = vperm.xlu0 %531, %v447
  %v533 = vpop.permute.xlu0 %532
  %534 = vset.pattern.permute.xlu0 0
  %535 = vperm.xlu0 %534, %v448
  %v536 = vpop.permute.xlu0 %535
  %537 = vset.pattern.permute.xlu0 0
  %538 = vperm.xlu0 %537, %v449
  %v539 = vpop.permute.xlu0 %538
  %540 = vset.pattern.permute.xlu0 0
  %541 = vperm.xlu0 %540, %v450
  %v542 = vpop.permute.xlu0 %541
  %543 = vset.pattern.permute.xlu0 0
  %544 = vperm.xlu0 %543, %v451
  %v545 = vpop.permute.xlu0 %544
  %546 = vset.pattern.permute.xlu0 0
  %547 = vperm.xlu0 %546, %v452
  %v548 = vpop.permute.xlu0 %547
  %vm549 = vcmp.eq.s32.totalorder %v455, 1
  %vm550 = vcmp.eq.s32.totalorder %v458, 1
  %vm551 = vcmp.eq.s32.totalorder %v461, 1
  %vm552 = vcmp.eq.s32.totalorder %v464, 1
  %vm553 = vcmp.eq.s32.totalorder %v467, 1
  %vm554 = vcmp.eq.s32.totalorder %v470, 1
  %vm555 = vcmp.eq.s32.totalorder %v473, 1
  %vm556 = vcmp.eq.s32.totalorder %v476, 1
  %vm557 = vcmp.eq.s32.totalorder %v479, 1
  %vm558 = vcmp.eq.s32.totalorder %v482, 1
  %vm559 = vcmp.eq.s32.totalorder %v485, 1
  %vm560 = vcmp.eq.s32.totalorder %v488, 1
  %vm561 = vcmp.eq.s32.totalorder %v491, 1
  %vm562 = vcmp.eq.s32.totalorder %v494, 1
  %vm563 = vcmp.eq.s32.totalorder %v497, 1
  %vm564 = vcmp.eq.s32.totalorder %v500, 1
  %vm565 = vcmp.eq.s32.totalorder %v503, 1
  %vm566 = vcmp.eq.s32.totalorder %v506, 1
  %vm567 = vcmp.eq.s32.totalorder %v509, 1
  %vm568 = vcmp.eq.s32.totalorder %v512, 1
  %vm569 = vcmp.eq.s32.totalorder %v515, 1
  %vm570 = vcmp.eq.s32.totalorder %v518, 1
  %vm571 = vcmp.eq.s32.totalorder %v521, 1
  %vm572 = vcmp.eq.s32.totalorder %v524, 1
  %vm573 = vcmp.eq.s32.totalorder %v527, 1
  %vm574 = vcmp.eq.s32.totalorder %v530, 1
  %vm575 = vcmp.eq.s32.totalorder %v533, 1
  %vm576 = vcmp.eq.s32.totalorder %v536, 1
  %vm577 = vcmp.eq.s32.totalorder %v539, 1
  %vm578 = vcmp.eq.s32.totalorder %v542, 1
  %vm579 = vcmp.eq.s32.totalorder %v545, 1
  %vm580 = vcmp.eq.s32.totalorder %v548, 1
  %v581 = vlaneseq
  %v582 = vshrl.u32 %v581, 7
  %v583 = vsub.s32 5, %v582
  %v584 = vrot.slane %v23, %v583
  %v585 = vlaneseq
  %v586 = vshrl.u32 %v585, 7
  %v587 = vsub.s32 5, %v586
  %v588 = vrot.slane %v24, %v587
  %v589 = vsel %vm549, %v584, %v325
  %v590 = vsel %vm549, %v588, %v326
  %v591 = vsel %vm550, %v584, %v327
  %v592 = vsel %vm550, %v588, %v328
  %v593 = vsel %vm551, %v584, %v329
  %v594 = vsel %vm551, %v588, %v330
  %v595 = vsel %vm552, %v584, %v331
  %v596 = vsel %vm552, %v588, %v332
  %v597 = vsel %vm553, %v584, %v333
  %v598 = vsel %vm553, %v588, %v334
  %v599 = vsel %vm554, %v584, %v335
  %v600 = vsel %vm554, %v588, %v336
  %v601 = vsel %vm555, %v584, %v337
  %v602 = vsel %vm555, %v588, %v338
  %v603 = vsel %vm556, %v584, %v339
  %v604 = vsel %vm556, %v588, %v340
  %v605 = vsel %vm557, %v584, %v341
  %v606 = vsel %vm557, %v588, %v342
  %v607 = vsel %vm558, %v584, %v343
  %v608 = vsel %vm558, %v588, %v344
  %v609 = vsel %vm559, %v584, %v345
  %v610 = vsel %vm559, %v588, %v346
  %v611 = vsel %vm560, %v584, %v347
  %v612 = vsel %vm560, %v588, %v348
  %v613 = vsel %vm561, %v584, %v349
  %v614 = vsel %vm561, %v588, %v350
  %v615 = vsel %vm562, %v584, %v351
  %v616 = vsel %vm562, %v588, %v352
  %v617 = vsel %vm563, %v584, %v353
  %v618 = vsel %vm563, %v588, %v354
  %v619 = vsel %vm564, %v584, %v355
  %v620 = vsel %vm564, %v588, %v356
  %v621 = vsel %vm565, %v584, %v357
  %v622 = vsel %vm565, %v588, %v358
  %v623 = vsel %vm566, %v584, %v359
  %v624 = vsel %vm566, %v588, %v360
  %v625 = vsel %vm567, %v584, %v361
  %v626 = vsel %vm567, %v588, %v362
  %v627 = vsel %vm568, %v584, %v363
  %v628 = vsel %vm568, %v588, %v364
  %v629 = vsel %vm569, %v584, %v365
  %v630 = vsel %vm569, %v588, %v366
  %v631 = vsel %vm570, %v584, %v367
  %v632 = vsel %vm570, %v588, %v368
  %v633 = vsel %vm571, %v584, %v369
  %v634 = vsel %vm571, %v588, %v370
  %v635 = vsel %vm572, %v584, %v371
  %v636 = vsel %vm572, %v588, %v372
  %v637 = vsel %vm573, %v584, %v373
  %v638 = vsel %vm573, %v588, %v374
  %v639 = vsel %vm574, %v584, %v375
  %v640 = vsel %vm574, %v588, %v376
  %v641 = vsel %vm575, %v584, %v377
  %v642 = vsel %vm575, %v588, %v378
  %v643 = vsel %vm576, %v584, %v379
  %v644 = vsel %vm576, %v588, %v380
  %v645 = vsel %vm577, %v584, %v381
  %v646 = vsel %vm577, %v588, %v382
  %v647 = vsel %vm578, %v584, %v383
  %v648 = vsel %vm578, %v588, %v384
  %v649 = vsel %vm579, %v584, %v385
  %v650 = vsel %vm579, %v588, %v386
  %v651 = vsel %vm580, %v584, %v387
  %v652 = vsel %vm580, %v588, %v388
  %vm653 = vcmp.eq.s32.totalorder %v61, 2
  %vm654 = vcmp.eq.s32.totalorder %v62, 2
  %vm655 = vcmp.eq.s32.totalorder %v63, 2
  %vm656 = vcmp.eq.s32.totalorder %v64, 2
  %vm657 = vcmp.eq.s32.totalorder %v65, 2
  %vm658 = vcmp.eq.s32.totalorder %v66, 2
  %vm659 = vcmp.eq.s32.totalorder %v67, 2
  %vm660 = vcmp.eq.s32.totalorder %v68, 2
  %vm661 = vcmp.eq.s32.totalorder %v69, 2
  %vm662 = vcmp.eq.s32.totalorder %v70, 2
  %vm663 = vcmp.eq.s32.totalorder %v71, 2
  %vm664 = vcmp.eq.s32.totalorder %v72, 2
  %vm665 = vcmp.eq.s32.totalorder %v73, 2
  %vm666 = vcmp.eq.s32.totalorder %v74, 2
  %vm667 = vcmp.eq.s32.totalorder %v75, 2
  %vm668 = vcmp.eq.s32.totalorder %v76, 2
  %vm669 = vcmp.eq.s32.totalorder %v77, 2
  %vm670 = vcmp.eq.s32.totalorder %v78, 2
  %vm671 = vcmp.eq.s32.totalorder %v79, 2
  %vm672 = vcmp.eq.s32.totalorder %v80, 2
  %vm673 = vcmp.eq.s32.totalorder %v81, 2
  %vm674 = vcmp.eq.s32.totalorder %v82, 2
  %vm675 = vcmp.eq.s32.totalorder %v83, 2
  %vm676 = vcmp.eq.s32.totalorder %v84, 2
  %vm677 = vcmp.eq.s32.totalorder %v85, 2
  %vm678 = vcmp.eq.s32.totalorder %v86, 2
  %vm679 = vcmp.eq.s32.totalorder %v87, 2
  %vm680 = vcmp.eq.s32.totalorder %v88, 2
  %vm681 = vcmp.eq.s32.totalorder %v89, 2
  %vm682 = vcmp.eq.s32.totalorder %v90, 2
  %vm683 = vcmp.eq.s32.totalorder %v91, 2
  %vm684 = vcmp.eq.s32.totalorder %v92, 2
  %v685 = vsel %vm653, 1, 0
  %v686 = vsel %vm654, 1, 0
  %v687 = vsel %vm655, 1, 0
  %v688 = vsel %vm656, 1, 0
  %v689 = vsel %vm657, 1, 0
  %v690 = vsel %vm658, 1, 0
  %v691 = vsel %vm659, 1, 0
  %v692 = vsel %vm660, 1, 0
  %v693 = vsel %vm661, 1, 0
  %v694 = vsel %vm662, 1, 0
  %v695 = vsel %vm663, 1, 0
  %v696 = vsel %vm664, 1, 0
  %v697 = vsel %vm665, 1, 0
  %v698 = vsel %vm666, 1, 0
  %v699 = vsel %vm667, 1, 0
  %v700 = vsel %vm668, 1, 0
  %v701 = vsel %vm669, 1, 0
  %v702 = vsel %vm670, 1, 0
  %v703 = vsel %vm671, 1, 0
  %v704 = vsel %vm672, 1, 0
  %v705 = vsel %vm673, 1, 0
  %v706 = vsel %vm674, 1, 0
  %v707 = vsel %vm675, 1, 0
  %v708 = vsel %vm676, 1, 0
  %v709 = vsel %vm677, 1, 0
  %v710 = vsel %vm678, 1, 0
  %v711 = vsel %vm679, 1, 0
  %v712 = vsel %vm680, 1, 0
  %v713 = vsel %vm681, 1, 0
  %v714 = vsel %vm682, 1, 0
  %v715 = vsel %vm683, 1, 0
  %v716 = vsel %vm684, 1, 0
  %717 = vset.pattern.permute.xlu0 0
  %718 = vperm.xlu0 %717, %v685
  %v719 = vpop.permute.xlu0 %718
  %720 = vset.pattern.permute.xlu0 0
  %721 = vperm.xlu0 %720, %v686
  %v722 = vpop.permute.xlu0 %721
  %723 = vset.pattern.permute.xlu0 0
  %724 = vperm.xlu0 %723, %v687
  %v725 = vpop.permute.xlu0 %724
  %726 = vset.pattern.permute.xlu0 0
  %727 = vperm.xlu0 %726, %v688
  %v728 = vpop.permute.xlu0 %727
  %729 = vset.pattern.permute.xlu0 0
  %730 = vperm.xlu0 %729, %v689
  %v731 = vpop.permute.xlu0 %730
  %732 = vset.pattern.permute.xlu0 0
  %733 = vperm.xlu0 %732, %v690
  %v734 = vpop.permute.xlu0 %733
  %735 = vset.pattern.permute.xlu0 0
  %736 = vperm.xlu0 %735, %v691
  %v737 = vpop.permute.xlu0 %736
  %738 = vset.pattern.permute.xlu0 0
  %739 = vperm.xlu0 %738, %v692
  %v740 = vpop.permute.xlu0 %739
  %741 = vset.pattern.permute.xlu0 0
  %742 = vperm.xlu0 %741, %v693
  %v743 = vpop.permute.xlu0 %742
  %744 = vset.pattern.permute.xlu0 0
  %745 = vperm.xlu0 %744, %v694
  %v746 = vpop.permute.xlu0 %745
  %747 = vset.pattern.permute.xlu0 0
  %748 = vperm.xlu0 %747, %v695
  %v749 = vpop.permute.xlu0 %748
  %750 = vset.pattern.permute.xlu0 0
  %751 = vperm.xlu0 %750, %v696
  %v752 = vpop.permute.xlu0 %751
  %753 = vset.pattern.permute.xlu0 0
  %754 = vperm.xlu0 %753, %v697
  %v755 = vpop.permute.xlu0 %754
  %756 = vset.pattern.permute.xlu0 0
  %757 = vperm.xlu0 %756, %v698
  %v758 = vpop.permute.xlu0 %757
  %759 = vset.pattern.permute.xlu0 0
  %760 = vperm.xlu0 %759, %v699
  %v761 = vpop.permute.xlu0 %760
  %762 = vset.pattern.permute.xlu0 0
  %763 = vperm.xlu0 %762, %v700
  %v764 = vpop.permute.xlu0 %763
  %765 = vset.pattern.permute.xlu0 0
  %766 = vperm.xlu0 %765, %v701
  %v767 = vpop.permute.xlu0 %766
  %768 = vset.pattern.permute.xlu0 0
  %769 = vperm.xlu0 %768, %v702
  %v770 = vpop.permute.xlu0 %769
  %771 = vset.pattern.permute.xlu0 0
  %772 = vperm.xlu0 %771, %v703
  %v773 = vpop.permute.xlu0 %772
  %774 = vset.pattern.permute.xlu0 0
  %775 = vperm.xlu0 %774, %v704
  %v776 = vpop.permute.xlu0 %775
  %777 = vset.pattern.permute.xlu0 0
  %778 = vperm.xlu0 %777, %v705
  %v779 = vpop.permute.xlu0 %778
  %780 = vset.pattern.permute.xlu0 0
  %781 = vperm.xlu0 %780, %v706
  %v782 = vpop.permute.xlu0 %781
  %783 = vset.pattern.permute.xlu0 0
  %784 = vperm.xlu0 %783, %v707
  %v785 = vpop.permute.xlu0 %784
  %786 = vset.pattern.permute.xlu0 0
  %787 = vperm.xlu0 %786, %v708
  %v788 = vpop.permute.xlu0 %787
  %789 = vset.pattern.permute.xlu0 0
  %790 = vperm.xlu0 %789, %v709
  %v791 = vpop.permute.xlu0 %790
  %792 = vset.pattern.permute.xlu0 0
  %793 = vperm.xlu0 %792, %v710
  %v794 = vpop.permute.xlu0 %793
  %795 = vset.pattern.permute.xlu0 0
  %796 = vperm.xlu0 %795, %v711
  %v797 = vpop.permute.xlu0 %796
  %798 = vset.pattern.permute.xlu0 0
  %799 = vperm.xlu0 %798, %v712
  %v800 = vpop.permute.xlu0 %799
  %801 = vset.pattern.permute.xlu0 0
  %802 = vperm.xlu0 %801, %v713
  %v803 = vpop.permute.xlu0 %802
  %804 = vset.pattern.permute.xlu0 0
  %805 = vperm.xlu0 %804, %v714
  %v806 = vpop.permute.xlu0 %805
  %807 = vset.pattern.permute.xlu0 0
  %808 = vperm.xlu0 %807, %v715
  %v809 = vpop.permute.xlu0 %808
  %810 = vset.pattern.permute.xlu0 0
  %811 = vperm.xlu0 %810, %v716
  %v812 = vpop.permute.xlu0 %811
  %vm813 = vcmp.eq.s32.totalorder %v719, 1
  %vm814 = vcmp.eq.s32.totalorder %v722, 1
  %vm815 = vcmp.eq.s32.totalorder %v725, 1
  %vm816 = vcmp.eq.s32.totalorder %v728, 1
  %vm817 = vcmp.eq.s32.totalorder %v731, 1
  %vm818 = vcmp.eq.s32.totalorder %v734, 1
  %vm819 = vcmp.eq.s32.totalorder %v737, 1
  %vm820 = vcmp.eq.s32.totalorder %v740, 1
  %vm821 = vcmp.eq.s32.totalorder %v743, 1
  %vm822 = vcmp.eq.s32.totalorder %v746, 1
  %vm823 = vcmp.eq.s32.totalorder %v749, 1
  %vm824 = vcmp.eq.s32.totalorder %v752, 1
  %vm825 = vcmp.eq.s32.totalorder %v755, 1
  %vm826 = vcmp.eq.s32.totalorder %v758, 1
  %vm827 = vcmp.eq.s32.totalorder %v761, 1
  %vm828 = vcmp.eq.s32.totalorder %v764, 1
  %vm829 = vcmp.eq.s32.totalorder %v767, 1
  %vm830 = vcmp.eq.s32.totalorder %v770, 1
  %vm831 = vcmp.eq.s32.totalorder %v773, 1
  %vm832 = vcmp.eq.s32.totalorder %v776, 1
  %vm833 = vcmp.eq.s32.totalorder %v779, 1
  %vm834 = vcmp.eq.s32.totalorder %v782, 1
  %vm835 = vcmp.eq.s32.totalorder %v785, 1
  %vm836 = vcmp.eq.s32.totalorder %v788, 1
  %vm837 = vcmp.eq.s32.totalorder %v791, 1
  %vm838 = vcmp.eq.s32.totalorder %v794, 1
  %vm839 = vcmp.eq.s32.totalorder %v797, 1
  %vm840 = vcmp.eq.s32.totalorder %v800, 1
  %vm841 = vcmp.eq.s32.totalorder %v803, 1
  %vm842 = vcmp.eq.s32.totalorder %v806, 1
  %vm843 = vcmp.eq.s32.totalorder %v809, 1
  %vm844 = vcmp.eq.s32.totalorder %v812, 1
  %v845 = vlaneseq
  %v846 = vshrl.u32 %v845, 7
  %v847 = vsub.s32 6, %v846
  %v848 = vrot.slane %v23, %v847
  %v849 = vlaneseq
  %v850 = vshrl.u32 %v849, 7
  %v851 = vsub.s32 6, %v850
  %v852 = vrot.slane %v24, %v851
  %v853 = vsel %vm813, %v848, %v589
  %v854 = vsel %vm813, %v852, %v590
  %v855 = vsel %vm814, %v848, %v591
  %v856 = vsel %vm814, %v852, %v592
  %v857 = vsel %vm815, %v848, %v593
  %v858 = vsel %vm815, %v852, %v594
  %v859 = vsel %vm816, %v848, %v595
  %v860 = vsel %vm816, %v852, %v596
  %v861 = vsel %vm817, %v848, %v597
  %v862 = vsel %vm817, %v852, %v598
  %v863 = vsel %vm818, %v848, %v599
  %v864 = vsel %vm818, %v852, %v600
  %v865 = vsel %vm819, %v848, %v601
  %v866 = vsel %vm819, %v852, %v602
  %v867 = vsel %vm820, %v848, %v603
  %v868 = vsel %vm820, %v852, %v604
  %v869 = vsel %vm821, %v848, %v605
  %v870 = vsel %vm821, %v852, %v606
  %v871 = vsel %vm822, %v848, %v607
  %v872 = vsel %vm822, %v852, %v608
  %v873 = vsel %vm823, %v848, %v609
  %v874 = vsel %vm823, %v852, %v610
  %v875 = vsel %vm824, %v848, %v611
  %v876 = vsel %vm824, %v852, %v612
  %v877 = vsel %vm825, %v848, %v613
  %v878 = vsel %vm825, %v852, %v614
  %v879 = vsel %vm826, %v848, %v615
  %v880 = vsel %vm826, %v852, %v616
  %v881 = vsel %vm827, %v848, %v617
  %v882 = vsel %vm827, %v852, %v618
  %v883 = vsel %vm828, %v848, %v619
  %v884 = vsel %vm828, %v852, %v620
  %v885 = vsel %vm829, %v848, %v621
  %v886 = vsel %vm829, %v852, %v622
  %v887 = vsel %vm830, %v848, %v623
  %v888 = vsel %vm830, %v852, %v624
  %v889 = vsel %vm831, %v848, %v625
  %v890 = vsel %vm831, %v852, %v626
  %v891 = vsel %vm832, %v848, %v627
  %v892 = vsel %vm832, %v852, %v628
  %v893 = vsel %vm833, %v848, %v629
  %v894 = vsel %vm833, %v852, %v630
  %v895 = vsel %vm834, %v848, %v631
  %v896 = vsel %vm834, %v852, %v632
  %v897 = vsel %vm835, %v848, %v633
  %v898 = vsel %vm835, %v852, %v634
  %v899 = vsel %vm836, %v848, %v635
  %v900 = vsel %vm836, %v852, %v636
  %v901 = vsel %vm837, %v848, %v637
  %v902 = vsel %vm837, %v852, %v638
  %v903 = vsel %vm838, %v848, %v639
  %v904 = vsel %vm838, %v852, %v640
  %v905 = vsel %vm839, %v848, %v641
  %v906 = vsel %vm839, %v852, %v642
  %v907 = vsel %vm840, %v848, %v643
  %v908 = vsel %vm840, %v852, %v644
  %v909 = vsel %vm841, %v848, %v645
  %v910 = vsel %vm841, %v852, %v646
  %v911 = vsel %vm842, %v848, %v647
  %v912 = vsel %vm842, %v852, %v648
  %v913 = vsel %vm843, %v848, %v649
  %v914 = vsel %vm843, %v852, %v650
  %v915 = vsel %vm844, %v848, %v651
  %v916 = vsel %vm844, %v852, %v652
  %vm917 = vcmp.eq.s32.totalorder %v61, 3
  %vm918 = vcmp.eq.s32.totalorder %v62, 3
  %vm919 = vcmp.eq.s32.totalorder %v63, 3
  %vm920 = vcmp.eq.s32.totalorder %v64, 3
  %vm921 = vcmp.eq.s32.totalorder %v65, 3
  %vm922 = vcmp.eq.s32.totalorder %v66, 3
  %vm923 = vcmp.eq.s32.totalorder %v67, 3
  %vm924 = vcmp.eq.s32.totalorder %v68, 3
  %vm925 = vcmp.eq.s32.totalorder %v69, 3
  %vm926 = vcmp.eq.s32.totalorder %v70, 3
  %vm927 = vcmp.eq.s32.totalorder %v71, 3
  %vm928 = vcmp.eq.s32.totalorder %v72, 3
  %vm929 = vcmp.eq.s32.totalorder %v73, 3
  %vm930 = vcmp.eq.s32.totalorder %v74, 3
  %vm931 = vcmp.eq.s32.totalorder %v75, 3
  %vm932 = vcmp.eq.s32.totalorder %v76, 3
  %vm933 = vcmp.eq.s32.totalorder %v77, 3
  %vm934 = vcmp.eq.s32.totalorder %v78, 3
  %vm935 = vcmp.eq.s32.totalorder %v79, 3
  %vm936 = vcmp.eq.s32.totalorder %v80, 3
  %vm937 = vcmp.eq.s32.totalorder %v81, 3
  %vm938 = vcmp.eq.s32.totalorder %v82, 3
  %vm939 = vcmp.eq.s32.totalorder %v83, 3
  %vm940 = vcmp.eq.s32.totalorder %v84, 3
  %vm941 = vcmp.eq.s32.totalorder %v85, 3
  %vm942 = vcmp.eq.s32.totalorder %v86, 3
  %vm943 = vcmp.eq.s32.totalorder %v87, 3
  %vm944 = vcmp.eq.s32.totalorder %v88, 3
  %vm945 = vcmp.eq.s32.totalorder %v89, 3
  %vm946 = vcmp.eq.s32.totalorder %v90, 3
  %vm947 = vcmp.eq.s32.totalorder %v91, 3
  %vm948 = vcmp.eq.s32.totalorder %v92, 3
  %v949 = vsel %vm917, 1, 0
  %v950 = vsel %vm918, 1, 0
  %v951 = vsel %vm919, 1, 0
  %v952 = vsel %vm920, 1, 0
  %v953 = vsel %vm921, 1, 0
  %v954 = vsel %vm922, 1, 0
  %v955 = vsel %vm923, 1, 0
  %v956 = vsel %vm924, 1, 0
  %v957 = vsel %vm925, 1, 0
  %v958 = vsel %vm926, 1, 0
  %v959 = vsel %vm927, 1, 0
  %v960 = vsel %vm928, 1, 0
  %v961 = vsel %vm929, 1, 0
  %v962 = vsel %vm930, 1, 0
  %v963 = vsel %vm931, 1, 0
  %v964 = vsel %vm932, 1, 0
  %v965 = vsel %vm933, 1, 0
  %v966 = vsel %vm934, 1, 0
  %v967 = vsel %vm935, 1, 0
  %v968 = vsel %vm936, 1, 0
  %v969 = vsel %vm937, 1, 0
  %v970 = vsel %vm938, 1, 0
  %v971 = vsel %vm939, 1, 0
  %v972 = vsel %vm940, 1, 0
  %v973 = vsel %vm941, 1, 0
  %v974 = vsel %vm942, 1, 0
  %v975 = vsel %vm943, 1, 0
  %v976 = vsel %vm944, 1, 0
  %v977 = vsel %vm945, 1, 0
  %v978 = vsel %vm946, 1, 0
  %v979 = vsel %vm947, 1, 0
  %v980 = vsel %vm948, 1, 0
  %981 = vset.pattern.permute.xlu0 0
  %982 = vperm.xlu0 %981, %v949
  %v983 = vpop.permute.xlu0 %982
  %984 = vset.pattern.permute.xlu0 0
  %985 = vperm.xlu0 %984, %v950
  %v986 = vpop.permute.xlu0 %985
  %987 = vset.pattern.permute.xlu0 0
  %988 = vperm.xlu0 %987, %v951
  %v989 = vpop.permute.xlu0 %988
  %990 = vset.pattern.permute.xlu0 0
  %991 = vperm.xlu0 %990, %v952
  %v992 = vpop.permute.xlu0 %991
  %993 = vset.pattern.permute.xlu0 0
  %994 = vperm.xlu0 %993, %v953
  %v995 = vpop.permute.xlu0 %994
  %996 = vset.pattern.permute.xlu0 0
  %997 = vperm.xlu0 %996, %v954
  %v998 = vpop.permute.xlu0 %997
  %999 = vset.pattern.permute.xlu0 0
  %1000 = vperm.xlu0 %999, %v955
  %v1001 = vpop.permute.xlu0 %1000
  %1002 = vset.pattern.permute.xlu0 0
  %1003 = vperm.xlu0 %1002, %v956
  %v1004 = vpop.permute.xlu0 %1003
  %1005 = vset.pattern.permute.xlu0 0
  %1006 = vperm.xlu0 %1005, %v957
  %v1007 = vpop.permute.xlu0 %1006
  %1008 = vset.pattern.permute.xlu0 0
  %1009 = vperm.xlu0 %1008, %v958
  %v1010 = vpop.permute.xlu0 %1009
  %1011 = vset.pattern.permute.xlu0 0
  %1012 = vperm.xlu0 %1011, %v959
  %v1013 = vpop.permute.xlu0 %1012
  %1014 = vset.pattern.permute.xlu0 0
  %1015 = vperm.xlu0 %1014, %v960
  %v1016 = vpop.permute.xlu0 %1015
  %1017 = vset.pattern.permute.xlu0 0
  %1018 = vperm.xlu0 %1017, %v961
  %v1019 = vpop.permute.xlu0 %1018
  %1020 = vset.pattern.permute.xlu0 0
  %1021 = vperm.xlu0 %1020, %v962
  %v1022 = vpop.permute.xlu0 %1021
  %1023 = vset.pattern.permute.xlu0 0
  %1024 = vperm.xlu0 %1023, %v963
  %v1025 = vpop.permute.xlu0 %1024
  %1026 = vset.pattern.permute.xlu0 0
  %1027 = vperm.xlu0 %1026, %v964
  %v1028 = vpop.permute.xlu0 %1027
  %1029 = vset.pattern.permute.xlu0 0
  %1030 = vperm.xlu0 %1029, %v965
  %v1031 = vpop.permute.xlu0 %1030
  %1032 = vset.pattern.permute.xlu0 0
  %1033 = vperm.xlu0 %1032, %v966
  %v1034 = vpop.permute.xlu0 %1033
  %1035 = vset.pattern.permute.xlu0 0
  %1036 = vperm.xlu0 %1035, %v967
  %v1037 = vpop.permute.xlu0 %1036
  %1038 = vset.pattern.permute.xlu0 0
  %1039 = vperm.xlu0 %1038, %v968
  %v1040 = vpop.permute.xlu0 %1039
  %1041 = vset.pattern.permute.xlu0 0
  %1042 = vperm.xlu0 %1041, %v969
  %v1043 = vpop.permute.xlu0 %1042
  %1044 = vset.pattern.permute.xlu0 0
  %1045 = vperm.xlu0 %1044, %v970
  %v1046 = vpop.permute.xlu0 %1045
  %1047 = vset.pattern.permute.xlu0 0
  %1048 = vperm.xlu0 %1047, %v971
  %v1049 = vpop.permute.xlu0 %1048
  %1050 = vset.pattern.permute.xlu0 0
  %1051 = vperm.xlu0 %1050, %v972
  %v1052 = vpop.permute.xlu0 %1051
  %1053 = vset.pattern.permute.xlu0 0
  %1054 = vperm.xlu0 %1053, %v973
  %v1055 = vpop.permute.xlu0 %1054
  %1056 = vset.pattern.permute.xlu0 0
  %1057 = vperm.xlu0 %1056, %v974
  %v1058 = vpop.permute.xlu0 %1057
  %1059 = vset.pattern.permute.xlu0 0
  %1060 = vperm.xlu0 %1059, %v975
  %v1061 = vpop.permute.xlu0 %1060
  %1062 = vset.pattern.permute.xlu0 0
  %1063 = vperm.xlu0 %1062, %v976
  %v1064 = vpop.permute.xlu0 %1063
  %1065 = vset.pattern.permute.xlu0 0
  %1066 = vperm.xlu0 %1065, %v977
  %v1067 = vpop.permute.xlu0 %1066
  %1068 = vset.pattern.permute.xlu0 0
  %1069 = vperm.xlu0 %1068, %v978
  %v1070 = vpop.permute.xlu0 %1069
  %1071 = vset.pattern.permute.xlu0 0
  %1072 = vperm.xlu0 %1071, %v979
  %v1073 = vpop.permute.xlu0 %1072
  %1074 = vset.pattern.permute.xlu0 0
  %1075 = vperm.xlu0 %1074, %v980
  %v1076 = vpop.permute.xlu0 %1075
  %vm1077 = vcmp.eq.s32.totalorder %v983, 1
  %vm1078 = vcmp.eq.s32.totalorder %v986, 1
  %vm1079 = vcmp.eq.s32.totalorder %v989, 1
  %vm1080 = vcmp.eq.s32.totalorder %v992, 1
  %vm1081 = vcmp.eq.s32.totalorder %v995, 1
  %vm1082 = vcmp.eq.s32.totalorder %v998, 1
  %vm1083 = vcmp.eq.s32.totalorder %v1001, 1
  %vm1084 = vcmp.eq.s32.totalorder %v1004, 1
  %vm1085 = vcmp.eq.s32.totalorder %v1007, 1
  %vm1086 = vcmp.eq.s32.totalorder %v1010, 1
  %vm1087 = vcmp.eq.s32.totalorder %v1013, 1
  %vm1088 = vcmp.eq.s32.totalorder %v1016, 1
  %vm1089 = vcmp.eq.s32.totalorder %v1019, 1
  %vm1090 = vcmp.eq.s32.totalorder %v1022, 1
  %vm1091 = vcmp.eq.s32.totalorder %v1025, 1
  %vm1092 = vcmp.eq.s32.totalorder %v1028, 1
  %vm1093 = vcmp.eq.s32.totalorder %v1031, 1
  %vm1094 = vcmp.eq.s32.totalorder %v1034, 1
  %vm1095 = vcmp.eq.s32.totalorder %v1037, 1
  %vm1096 = vcmp.eq.s32.totalorder %v1040, 1
  %vm1097 = vcmp.eq.s32.totalorder %v1043, 1
  %vm1098 = vcmp.eq.s32.totalorder %v1046, 1
  %vm1099 = vcmp.eq.s32.totalorder %v1049, 1
  %vm1100 = vcmp.eq.s32.totalorder %v1052, 1
  %vm1101 = vcmp.eq.s32.totalorder %v1055, 1
  %vm1102 = vcmp.eq.s32.totalorder %v1058, 1
  %vm1103 = vcmp.eq.s32.totalorder %v1061, 1
  %vm1104 = vcmp.eq.s32.totalorder %v1064, 1
  %vm1105 = vcmp.eq.s32.totalorder %v1067, 1
  %vm1106 = vcmp.eq.s32.totalorder %v1070, 1
  %vm1107 = vcmp.eq.s32.totalorder %v1073, 1
  %vm1108 = vcmp.eq.s32.totalorder %v1076, 1
  %v1109 = vlaneseq
  %v1110 = vshrl.u32 %v1109, 7
  %v1111 = vsub.s32 7, %v1110
  %v1112 = vrot.slane %v23, %v1111
  %v1113 = vlaneseq
  %v1114 = vshrl.u32 %v1113, 7
  %v1115 = vsub.s32 7, %v1114
  %v1116 = vrot.slane %v24, %v1115
  %v1117 = vsel %vm1077, %v1112, %v853
  %v1118 = vsel %vm1077, %v1116, %v854
  %v1119 = vsel %vm1078, %v1112, %v855
  %v1120 = vsel %vm1078, %v1116, %v856
  %v1121 = vsel %vm1079, %v1112, %v857
  %v1122 = vsel %vm1079, %v1116, %v858
  %v1123 = vsel %vm1080, %v1112, %v859
  %v1124 = vsel %vm1080, %v1116, %v860
  %v1125 = vsel %vm1081, %v1112, %v861
  %v1126 = vsel %vm1081, %v1116, %v862
  %v1127 = vsel %vm1082, %v1112, %v863
  %v1128 = vsel %vm1082, %v1116, %v864
  %v1129 = vsel %vm1083, %v1112, %v865
  %v1130 = vsel %vm1083, %v1116, %v866
  %v1131 = vsel %vm1084, %v1112, %v867
  %v1132 = vsel %vm1084, %v1116, %v868
  %v1133 = vsel %vm1085, %v1112, %v869
  %v1134 = vsel %vm1085, %v1116, %v870
  %v1135 = vsel %vm1086, %v1112, %v871
  %v1136 = vsel %vm1086, %v1116, %v872
  %v1137 = vsel %vm1087, %v1112, %v873
  %v1138 = vsel %vm1087, %v1116, %v874
  %v1139 = vsel %vm1088, %v1112, %v875
  %v1140 = vsel %vm1088, %v1116, %v876
  %v1141 = vsel %vm1089, %v1112, %v877
  %v1142 = vsel %vm1089, %v1116, %v878
  %v1143 = vsel %vm1090, %v1112, %v879
  %v1144 = vsel %vm1090, %v1116, %v880
  %v1145 = vsel %vm1091, %v1112, %v881
  %v1146 = vsel %vm1091, %v1116, %v882
  %v1147 = vsel %vm1092, %v1112, %v883
  %v1148 = vsel %vm1092, %v1116, %v884
  %v1149 = vsel %vm1093, %v1112, %v885
  %v1150 = vsel %vm1093, %v1116, %v886
  %v1151 = vsel %vm1094, %v1112, %v887
  %v1152 = vsel %vm1094, %v1116, %v888
  %v1153 = vsel %vm1095, %v1112, %v889
  %v1154 = vsel %vm1095, %v1116, %v890
  %v1155 = vsel %vm1096, %v1112, %v891
  %v1156 = vsel %vm1096, %v1116, %v892
  %v1157 = vsel %vm1097, %v1112, %v893
  %v1158 = vsel %vm1097, %v1116, %v894
  %v1159 = vsel %vm1098, %v1112, %v895
  %v1160 = vsel %vm1098, %v1116, %v896
  %v1161 = vsel %vm1099, %v1112, %v897
  %v1162 = vsel %vm1099, %v1116, %v898
  %v1163 = vsel %vm1100, %v1112, %v899
  %v1164 = vsel %vm1100, %v1116, %v900
  %v1165 = vsel %vm1101, %v1112, %v901
  %v1166 = vsel %vm1101, %v1116, %v902
  %v1167 = vsel %vm1102, %v1112, %v903
  %v1168 = vsel %vm1102, %v1116, %v904
  %v1169 = vsel %vm1103, %v1112, %v905
  %v1170 = vsel %vm1103, %v1116, %v906
  %v1171 = vsel %vm1104, %v1112, %v907
  %v1172 = vsel %vm1104, %v1116, %v908
  %v1173 = vsel %vm1105, %v1112, %v909
  %v1174 = vsel %vm1105, %v1116, %v910
  %v1175 = vsel %vm1106, %v1112, %v911
  %v1176 = vsel %vm1106, %v1116, %v912
  %v1177 = vsel %vm1107, %v1112, %v913
  %v1178 = vsel %vm1107, %v1116, %v914
  %v1179 = vsel %vm1108, %v1112, %v915
  %v1180 = vsel %vm1108, %v1116, %v916
  %v1181 = vpack.c.bf16 %v94, %v93
  %v1182 = vpack.c.bf16 %v96, %v95
  %v1183 = vpack.c.bf16 %v98, %v97
  %v1184 = vpack.c.bf16 %v100, %v99
  %v1185 = vpack.c.bf16 %v102, %v101
  %v1186 = vpack.c.bf16 %v104, %v103
  %v1187 = vpack.c.bf16 %v106, %v105
  %v1188 = vpack.c.bf16 %v108, %v107
  %v1189 = vpack.c.bf16 %v110, %v109
  %v1190 = vpack.c.bf16 %v112, %v111
  %v1191 = vpack.c.bf16 %v114, %v113
  %v1192 = vpack.c.bf16 %v116, %v115
  %v1193 = vpack.c.bf16 %v118, %v117
  %v1194 = vpack.c.bf16 %v120, %v119
  %v1195 = vpack.c.bf16 %v122, %v121
  %v1196 = vpack.c.bf16 %v124, %v123
  %v1198 = vlaneseq
  %v1199 = vshrl.u32 %v1198, 7
  %v1200 = vsub.s32 0, %v1199
  %v1201 = vrot.slane %v18, %v1200
  %v1202 = vlaneseq
  %v1203 = vshrl.u32 %v1202, 7
  %v1204 = vsub.s32 1, %v1203
  %v1205 = vrot.slane %v18, %v1204
  %v1212 = vunpack.c.l.b16 %v57
  %v1213 = vunpack.c.h.b16 %v57
  %v1214 = vunpack.c.l.b16 %v58
  %v1215 = vunpack.c.h.b16 %v58
  %v1216 = vunpack.c.l.b16 %v59
  %v1217 = vunpack.c.h.b16 %v59
  %v1218 = vunpack.c.l.b16 %v60
  %v1219 = vunpack.c.h.b16 %v60
  %v1220 = vpack.c.b16 %v1214, %v1212
  %v1221 = vpack.c.b16 %v1215, %v1213
  %v1222 = vpack.c.b16 %v1218, %v1216
  %v1223 = vpack.c.b16 %v1219, %v1217
  %vm1228 = vcmask 261120
  %v1230 = vsel %vm1228, %v1181, 0
  %v1233 = vsel %vm1228, %v1182, 0
  %v1236 = vsel %vm1228, %v1183, 0
  %v1239 = vsel %vm1228, %v1184, 0
  %v1242 = vsel %vm1228, %v1185, 0
  %v1245 = vsel %vm1228, %v1186, 0
  %v1248 = vsel %vm1228, %v1187, 0
  %v1251 = vsel %vm1228, %v1188, 0
  %v1254 = vsel %vm1228, %v1189, 0
  %v1257 = vsel %vm1228, %v1190, 0
  %v1260 = vsel %vm1228, %v1191, 0
  %v1263 = vsel %vm1228, %v1192, 0
  %v1266 = vsel %vm1228, %v1193, 0
  %v1269 = vsel %vm1228, %v1194, 0
  %v1272 = vsel %vm1228, %v1195, 0
  %v1275 = vsel %vm1228, %v1196, 0
  %1277 = vmatprep.subr.bf16.mxu0 0
  %1278 = vmatpush1.bf16.msra.mxu0 0
  %1279 = vmatprep.subr.bf16.mxu0 0
  %1280 = vmatpush1.bf16.msra.mxu0 0
  %1281 = vmatprep.subr.bf16.mxu0 0
  %1282 = vmatpush1.bf16.msra.mxu0 0
  %1283 = vmatprep.subr.bf16.mxu0 0
  %1284 = vmatpush1.bf16.msra.mxu0 0
  %1285 = vmatprep.subr.bf16.mxu0 0
  %1286 = vmatpush1.bf16.msra.mxu0 0
  %1287 = vmatprep.subr.bf16.mxu0 0
  %1288 = vmatpush1.bf16.msra.mxu0 0
  %1289 = vmatprep.subr.bf16.mxu0 %v1223
  %1290 = vmatpush1.bf16.msra.mxu0 %v1222
  %1291 = vmatprep.subr.bf16.mxu0 %v1221
  %1292 = vmatpush1.bf16.msra.mxu0 %v1220
  %1293 = vmatprep.subr.bf16.mxu0 0
  %1294 = vmatpush2.bf16.msra.mxu0 0
  %1295 = vmatprep.subr.bf16.mxu0 0
  %1296 = vmatpush2.bf16.msra.mxu0 0
  %1297 = vmatprep.subr.bf16.mxu0 0
  %1298 = vmatpush2.bf16.msra.mxu0 0
  %1299 = vmatprep.subr.bf16.mxu0 0
  %1300 = vmatpush2.bf16.msra.mxu0 0
  %1301 = vmatprep.subr.bf16.mxu0 0
  %1302 = vmatpush2.bf16.msra.mxu0 0
  %1303 = vmatprep.subr.bf16.mxu0 0
  %1304 = vmatpush2.bf16.msra.mxu0 0
  %1305 = vmatprep.subr.bf16.mxu0 0
  %1306 = vmatpush2.bf16.msra.mxu0 0
  %1307 = vmatprep.subr.bf16.mxu0 0
  %1308 = vmatpush2.bf16.msra.mxu0 0
  %1309 = vmatprep.mubr.bf16.mxu0 0
  %1310 = vmatmul.mubr.bf16.gmra.mxu0 %v1230
  %v1311 = vpop.f32.mrf.mxu0
  %v1312 = vadd.f32 %v1201, %v1311
  %v1313 = vpop.f32.mrf.mxu0
  %v1314 = vadd.f32 %v1205, %v1313
  %v1315 = vpop.f32.mrf.mxu0
  %v1316 = vadd.f32 %v1201, %v1315
  %v1317 = vpop.f32.mrf.mxu0
  %v1318 = vadd.f32 %v1205, %v1317
  %1319 = vmatprep.mubr.bf16.mxu0 0
  %1320 = vmatmul.mubr.bf16.gmra.mxu0 %v1233
  %v1321 = vpop.f32.mrf.mxu0
  %v1322 = vadd.f32 %v1201, %v1321
  %v1323 = vpop.f32.mrf.mxu0
  %v1324 = vadd.f32 %v1205, %v1323
  %v1325 = vpop.f32.mrf.mxu0
  %v1326 = vadd.f32 %v1201, %v1325
  %v1327 = vpop.f32.mrf.mxu0
  %v1328 = vadd.f32 %v1205, %v1327
  %1329 = vmatprep.mubr.bf16.mxu0 0
  %1330 = vmatmul.mubr.bf16.gmra.mxu0 %v1236
  %v1331 = vpop.f32.mrf.mxu0
  %v1332 = vadd.f32 %v1201, %v1331
  %v1333 = vpop.f32.mrf.mxu0
  %v1334 = vadd.f32 %v1205, %v1333
  %v1335 = vpop.f32.mrf.mxu0
  %v1336 = vadd.f32 %v1201, %v1335
  %v1337 = vpop.f32.mrf.mxu0
  %v1338 = vadd.f32 %v1205, %v1337
  %1339 = vmatprep.mubr.bf16.mxu0 0
  %1340 = vmatmul.mubr.bf16.gmra.mxu0 %v1239
  %v1341 = vpop.f32.mrf.mxu0
  %v1342 = vadd.f32 %v1201, %v1341
  %v1343 = vpop.f32.mrf.mxu0
  %v1344 = vadd.f32 %v1205, %v1343
  %v1345 = vpop.f32.mrf.mxu0
  %v1346 = vadd.f32 %v1201, %v1345
  %v1347 = vpop.f32.mrf.mxu0
  %v1348 = vadd.f32 %v1205, %v1347
  %1349 = vmatprep.mubr.bf16.mxu0 0
  %1350 = vmatmul.mubr.bf16.gmra.mxu0 %v1242
  %v1351 = vpop.f32.mrf.mxu0
  %v1352 = vadd.f32 %v1201, %v1351
  %v1353 = vpop.f32.mrf.mxu0
  %v1354 = vadd.f32 %v1205, %v1353
  %v1355 = vpop.f32.mrf.mxu0
  %v1356 = vadd.f32 %v1201, %v1355
  %v1357 = vpop.f32.mrf.mxu0
  %v1358 = vadd.f32 %v1205, %v1357
  %1359 = vmatprep.mubr.bf16.mxu0 0
  %1360 = vmatmul.mubr.bf16.gmra.mxu0 %v1245
  %v1361 = vpop.f32.mrf.mxu0
  %v1362 = vadd.f32 %v1201, %v1361
  %v1363 = vpop.f32.mrf.mxu0
  %v1364 = vadd.f32 %v1205, %v1363
  %v1365 = vpop.f32.mrf.mxu0
  %v1366 = vadd.f32 %v1201, %v1365
  %v1367 = vpop.f32.mrf.mxu0
  %v1368 = vadd.f32 %v1205, %v1367
  %1369 = vmatprep.mubr.bf16.mxu0 0
  %1370 = vmatmul.mubr.bf16.gmra.mxu0 %v1248
  %v1371 = vpop.f32.mrf.mxu0
  %v1372 = vadd.f32 %v1201, %v1371
  %v1373 = vpop.f32.mrf.mxu0
  %v1374 = vadd.f32 %v1205, %v1373
  %v1375 = vpop.f32.mrf.mxu0
  %v1376 = vadd.f32 %v1201, %v1375
  %v1377 = vpop.f32.mrf.mxu0
  %v1378 = vadd.f32 %v1205, %v1377
  %1379 = vmatprep.mubr.bf16.mxu0 0
  %1380 = vmatmul.mubr.bf16.gmra.mxu0 %v1251
  %v1381 = vpop.f32.mrf.mxu0
  %v1382 = vadd.f32 %v1201, %v1381
  %v1383 = vpop.f32.mrf.mxu0
  %v1384 = vadd.f32 %v1205, %v1383
  %v1385 = vpop.f32.mrf.mxu0
  %v1386 = vadd.f32 %v1201, %v1385
  %v1387 = vpop.f32.mrf.mxu0
  %v1388 = vadd.f32 %v1205, %v1387
  %1389 = vmatprep.mubr.bf16.mxu0 0
  %1390 = vmatmul.mubr.bf16.gmra.mxu0 %v1254
  %v1391 = vpop.f32.mrf.mxu0
  %v1392 = vadd.f32 %v1201, %v1391
  %v1393 = vpop.f32.mrf.mxu0
  %v1394 = vadd.f32 %v1205, %v1393
  %v1395 = vpop.f32.mrf.mxu0
  %v1396 = vadd.f32 %v1201, %v1395
  %v1397 = vpop.f32.mrf.mxu0
  %v1398 = vadd.f32 %v1205, %v1397
  %1399 = vmatprep.mubr.bf16.mxu0 0
  %1400 = vmatmul.mubr.bf16.gmra.mxu0 %v1257
  %v1401 = vpop.f32.mrf.mxu0
  %v1402 = vadd.f32 %v1201, %v1401
  %v1403 = vpop.f32.mrf.mxu0
  %v1404 = vadd.f32 %v1205, %v1403
  %v1405 = vpop.f32.mrf.mxu0
  %v1406 = vadd.f32 %v1201, %v1405
  %v1407 = vpop.f32.mrf.mxu0
  %v1408 = vadd.f32 %v1205, %v1407
  %1409 = vmatprep.mubr.bf16.mxu0 0
  %1410 = vmatmul.mubr.bf16.gmra.mxu0 %v1260
  %v1411 = vpop.f32.mrf.mxu0
  %v1412 = vadd.f32 %v1201, %v1411
  %v1413 = vpop.f32.mrf.mxu0
  %v1414 = vadd.f32 %v1205, %v1413
  %v1415 = vpop.f32.mrf.mxu0
  %v1416 = vadd.f32 %v1201, %v1415
  %v1417 = vpop.f32.mrf.mxu0
  %v1418 = vadd.f32 %v1205, %v1417
  %1419 = vmatprep.mubr.bf16.mxu0 0
  %1420 = vmatmul.mubr.bf16.gmra.mxu0 %v1263
  %v1421 = vpop.f32.mrf.mxu0
  %v1422 = vadd.f32 %v1201, %v1421
  %v1423 = vpop.f32.mrf.mxu0
  %v1424 = vadd.f32 %v1205, %v1423
  %v1425 = vpop.f32.mrf.mxu0
  %v1426 = vadd.f32 %v1201, %v1425
  %v1427 = vpop.f32.mrf.mxu0
  %v1428 = vadd.f32 %v1205, %v1427
  %1429 = vmatprep.mubr.bf16.mxu0 0
  %1430 = vmatmul.mubr.bf16.gmra.mxu0 %v1266
  %v1431 = vpop.f32.mrf.mxu0
  %v1432 = vadd.f32 %v1201, %v1431
  %v1433 = vpop.f32.mrf.mxu0
  %v1434 = vadd.f32 %v1205, %v1433
  %v1435 = vpop.f32.mrf.mxu0
  %v1436 = vadd.f32 %v1201, %v1435
  %v1437 = vpop.f32.mrf.mxu0
  %v1438 = vadd.f32 %v1205, %v1437
  %1439 = vmatprep.mubr.bf16.mxu0 0
  %1440 = vmatmul.mubr.bf16.gmra.mxu0 %v1269
  %v1441 = vpop.f32.mrf.mxu0
  %v1442 = vadd.f32 %v1201, %v1441
  %v1443 = vpop.f32.mrf.mxu0
  %v1444 = vadd.f32 %v1205, %v1443
  %v1445 = vpop.f32.mrf.mxu0
  %v1446 = vadd.f32 %v1201, %v1445
  %v1447 = vpop.f32.mrf.mxu0
  %v1448 = vadd.f32 %v1205, %v1447
  %1449 = vmatprep.mubr.bf16.mxu0 0
  %1450 = vmatmul.mubr.bf16.gmra.mxu0 %v1272
  %v1451 = vpop.f32.mrf.mxu0
  %v1452 = vadd.f32 %v1201, %v1451
  %v1453 = vpop.f32.mrf.mxu0
  %v1454 = vadd.f32 %v1205, %v1453
  %v1455 = vpop.f32.mrf.mxu0
  %v1456 = vadd.f32 %v1201, %v1455
  %v1457 = vpop.f32.mrf.mxu0
  %v1458 = vadd.f32 %v1205, %v1457
  %1459 = vmatprep.mubr.bf16.mxu0 0
  %1460 = vmatmul.mubr.bf16.gmra.mxu0 %v1275
  %v1461 = vpop.f32.mrf.mxu0
  %v1462 = vadd.f32 %v1201, %v1461
  %v1463 = vpop.f32.mrf.mxu0
  %v1464 = vadd.f32 %v1205, %v1463
  %v1465 = vpop.f32.mrf.mxu0
  %v1466 = vadd.f32 %v1201, %v1465
  %v1467 = vpop.f32.mrf.mxu0
  %v1468 = vadd.f32 %v1205, %v1467
  %1469 = vdwg.mxu0
  %v1470 = vadd.f32 %v1312, %v1117
  %v1471 = vadd.f32 %v1314, %v1118
  %v1472 = vadd.f32 %v1316, %v1119
  %v1473 = vadd.f32 %v1318, %v1120
  %v1474 = vadd.f32 %v1322, %v1121
  %v1475 = vadd.f32 %v1324, %v1122
  %v1476 = vadd.f32 %v1326, %v1123
  %v1477 = vadd.f32 %v1328, %v1124
  %v1478 = vadd.f32 %v1332, %v1125
  %v1479 = vadd.f32 %v1334, %v1126
  %v1480 = vadd.f32 %v1336, %v1127
  %v1481 = vadd.f32 %v1338, %v1128
  %v1482 = vadd.f32 %v1342, %v1129
  %v1483 = vadd.f32 %v1344, %v1130
  %v1484 = vadd.f32 %v1346, %v1131
  %v1485 = vadd.f32 %v1348, %v1132
  %v1486 = vadd.f32 %v1352, %v1133
  %v1487 = vadd.f32 %v1354, %v1134
  %v1488 = vadd.f32 %v1356, %v1135
  %v1489 = vadd.f32 %v1358, %v1136
  %v1490 = vadd.f32 %v1362, %v1137
  %v1491 = vadd.f32 %v1364, %v1138
  %v1492 = vadd.f32 %v1366, %v1139
  %v1493 = vadd.f32 %v1368, %v1140
  %v1494 = vadd.f32 %v1372, %v1141
  %v1495 = vadd.f32 %v1374, %v1142
  %v1496 = vadd.f32 %v1376, %v1143
  %v1497 = vadd.f32 %v1378, %v1144
  %v1498 = vadd.f32 %v1382, %v1145
  %v1499 = vadd.f32 %v1384, %v1146
  %v1500 = vadd.f32 %v1386, %v1147
  %v1501 = vadd.f32 %v1388, %v1148
  %v1502 = vadd.f32 %v1392, %v1149
  %v1503 = vadd.f32 %v1394, %v1150
  %v1504 = vadd.f32 %v1396, %v1151
  %v1505 = vadd.f32 %v1398, %v1152
  %v1506 = vadd.f32 %v1402, %v1153
  %v1507 = vadd.f32 %v1404, %v1154
  %v1508 = vadd.f32 %v1406, %v1155
  %v1509 = vadd.f32 %v1408, %v1156
  %v1510 = vadd.f32 %v1412, %v1157
  %v1511 = vadd.f32 %v1414, %v1158
  %v1512 = vadd.f32 %v1416, %v1159
  %v1513 = vadd.f32 %v1418, %v1160
  %v1514 = vadd.f32 %v1422, %v1161
  %v1515 = vadd.f32 %v1424, %v1162
  %v1516 = vadd.f32 %v1426, %v1163
  %v1517 = vadd.f32 %v1428, %v1164
  %v1518 = vadd.f32 %v1432, %v1165
  %v1519 = vadd.f32 %v1434, %v1166
  %v1520 = vadd.f32 %v1436, %v1167
  %v1521 = vadd.f32 %v1438, %v1168
  %v1522 = vadd.f32 %v1442, %v1169
  %v1523 = vadd.f32 %v1444, %v1170
  %v1524 = vadd.f32 %v1446, %v1171
  %v1525 = vadd.f32 %v1448, %v1172
  %v1526 = vadd.f32 %v1452, %v1173
  %v1527 = vadd.f32 %v1454, %v1174
  %v1528 = vadd.f32 %v1456, %v1175
  %v1529 = vadd.f32 %v1458, %v1176
  %v1530 = vadd.f32 %v1462, %v1177
  %v1531 = vadd.f32 %v1464, %v1178
  %v1532 = vadd.f32 %v1466, %v1179
  %v1533 = vadd.f32 %v1468, %v1180
  %v1534 = vmax.f32 %v1470, 0.0
  %v1535 = vmax.f32 %v1471, 0.0
  %v1536 = vmax.f32 %v1472, 0.0
  %v1537 = vmax.f32 %v1473, 0.0
  %v1538 = vmax.f32 %v1474, 0.0
  %v1539 = vmax.f32 %v1475, 0.0
  %v1540 = vmax.f32 %v1476, 0.0
  %v1541 = vmax.f32 %v1477, 0.0
  %v1542 = vmax.f32 %v1478, 0.0
  %v1543 = vmax.f32 %v1479, 0.0
  %v1544 = vmax.f32 %v1480, 0.0
  %v1545 = vmax.f32 %v1481, 0.0
  %v1546 = vmax.f32 %v1482, 0.0
  %v1547 = vmax.f32 %v1483, 0.0
  %v1548 = vmax.f32 %v1484, 0.0
  %v1549 = vmax.f32 %v1485, 0.0
  %v1550 = vmax.f32 %v1486, 0.0
  %v1551 = vmax.f32 %v1487, 0.0
  %v1552 = vmax.f32 %v1488, 0.0
  %v1553 = vmax.f32 %v1489, 0.0
  %v1554 = vmax.f32 %v1490, 0.0
  %v1555 = vmax.f32 %v1491, 0.0
  %v1556 = vmax.f32 %v1492, 0.0
  %v1557 = vmax.f32 %v1493, 0.0
  %v1558 = vmax.f32 %v1494, 0.0
  %v1559 = vmax.f32 %v1495, 0.0
  %v1560 = vmax.f32 %v1496, 0.0
  %v1561 = vmax.f32 %v1497, 0.0
  %v1562 = vmax.f32 %v1498, 0.0
  %v1563 = vmax.f32 %v1499, 0.0
  %v1564 = vmax.f32 %v1500, 0.0
  %v1565 = vmax.f32 %v1501, 0.0
  %v1566 = vmax.f32 %v1502, 0.0
  %v1567 = vmax.f32 %v1503, 0.0
  %v1568 = vmax.f32 %v1504, 0.0
  %v1569 = vmax.f32 %v1505, 0.0
  %v1570 = vmax.f32 %v1506, 0.0
  %v1571 = vmax.f32 %v1507, 0.0
  %v1572 = vmax.f32 %v1508, 0.0
  %v1573 = vmax.f32 %v1509, 0.0
  %v1574 = vmax.f32 %v1510, 0.0
  %v1575 = vmax.f32 %v1511, 0.0
  %v1576 = vmax.f32 %v1512, 0.0
  %v1577 = vmax.f32 %v1513, 0.0
  %v1578 = vmax.f32 %v1514, 0.0
  %v1579 = vmax.f32 %v1515, 0.0
  %v1580 = vmax.f32 %v1516, 0.0
  %v1581 = vmax.f32 %v1517, 0.0
  %v1582 = vmax.f32 %v1518, 0.0
  %v1583 = vmax.f32 %v1519, 0.0
  %v1584 = vmax.f32 %v1520, 0.0
  %v1585 = vmax.f32 %v1521, 0.0
  %v1586 = vmax.f32 %v1522, 0.0
  %v1587 = vmax.f32 %v1523, 0.0
  %v1588 = vmax.f32 %v1524, 0.0
  %v1589 = vmax.f32 %v1525, 0.0
  %v1590 = vmax.f32 %v1526, 0.0
  %v1591 = vmax.f32 %v1527, 0.0
  %v1592 = vmax.f32 %v1528, 0.0
  %v1593 = vmax.f32 %v1529, 0.0
  %v1594 = vmax.f32 %v1530, 0.0
  %v1595 = vmax.f32 %v1531, 0.0
  %v1596 = vmax.f32 %v1532, 0.0
  %v1597 = vmax.f32 %v1533, 0.0
  %v1598 = vmul.f32 %v1534, %v20
  %v1599 = vmul.f32 %v1536, %v20
  %v1600 = vmul.f32 %v1538, %v20
  %v1601 = vmul.f32 %v1540, %v20
  %v1602 = vmul.f32 %v1542, %v20
  %v1603 = vmul.f32 %v1544, %v20
  %v1604 = vmul.f32 %v1546, %v20
  %v1605 = vmul.f32 %v1548, %v20
  %v1606 = vmul.f32 %v1550, %v20
  %v1607 = vmul.f32 %v1552, %v20
  %v1608 = vmul.f32 %v1554, %v20
  %v1609 = vmul.f32 %v1556, %v20
  %v1610 = vmul.f32 %v1558, %v20
  %v1611 = vmul.f32 %v1560, %v20
  %v1612 = vmul.f32 %v1562, %v20
  %v1613 = vmul.f32 %v1564, %v20
  %v1614 = vmul.f32 %v1566, %v20
  %v1615 = vmul.f32 %v1568, %v20
  %v1616 = vmul.f32 %v1570, %v20
  %v1617 = vmul.f32 %v1572, %v20
  %v1618 = vmul.f32 %v1574, %v20
  %v1619 = vmul.f32 %v1576, %v20
  %v1620 = vmul.f32 %v1578, %v20
  %v1621 = vmul.f32 %v1580, %v20
  %v1622 = vmul.f32 %v1582, %v20
  %v1623 = vmul.f32 %v1584, %v20
  %v1624 = vmul.f32 %v1586, %v20
  %v1625 = vmul.f32 %v1588, %v20
  %v1626 = vmul.f32 %v1590, %v20
  %v1627 = vmul.f32 %v1592, %v20
  %v1628 = vmul.f32 %v1594, %v20
  %v1629 = vmul.f32 %v1596, %v20
  %1630 = vadd.xlane.f32.xlu0 %v1598
  %v1631 = vpop.xlane.xlu0 %1630
  %1632 = vadd.xlane.f32.xlu0 %v1599
  %v1633 = vpop.xlane.xlu0 %1632
  %1634 = vadd.xlane.f32.xlu0 %v1600
  %v1635 = vpop.xlane.xlu0 %1634
  %1636 = vadd.xlane.f32.xlu0 %v1601
  %v1637 = vpop.xlane.xlu0 %1636
  %1638 = vadd.xlane.f32.xlu0 %v1602
  %v1639 = vpop.xlane.xlu0 %1638
  %1640 = vadd.xlane.f32.xlu0 %v1603
  %v1641 = vpop.xlane.xlu0 %1640
  %1642 = vadd.xlane.f32.xlu0 %v1604
  %v1643 = vpop.xlane.xlu0 %1642
  %1644 = vadd.xlane.f32.xlu0 %v1605
  %v1645 = vpop.xlane.xlu0 %1644
  %1646 = vadd.xlane.f32.xlu0 %v1606
  %v1647 = vpop.xlane.xlu0 %1646
  %1648 = vadd.xlane.f32.xlu0 %v1607
  %v1649 = vpop.xlane.xlu0 %1648
  %1650 = vadd.xlane.f32.xlu0 %v1608
  %v1651 = vpop.xlane.xlu0 %1650
  %1652 = vadd.xlane.f32.xlu0 %v1609
  %v1653 = vpop.xlane.xlu0 %1652
  %1654 = vadd.xlane.f32.xlu0 %v1610
  %v1655 = vpop.xlane.xlu0 %1654
  %1656 = vadd.xlane.f32.xlu0 %v1611
  %v1657 = vpop.xlane.xlu0 %1656
  %1658 = vadd.xlane.f32.xlu0 %v1612
  %v1659 = vpop.xlane.xlu0 %1658
  %1660 = vadd.xlane.f32.xlu0 %v1613
  %v1661 = vpop.xlane.xlu0 %1660
  %1662 = vadd.xlane.f32.xlu0 %v1614
  %v1663 = vpop.xlane.xlu0 %1662
  %1664 = vadd.xlane.f32.xlu0 %v1615
  %v1665 = vpop.xlane.xlu0 %1664
  %1666 = vadd.xlane.f32.xlu0 %v1616
  %v1667 = vpop.xlane.xlu0 %1666
  %1668 = vadd.xlane.f32.xlu0 %v1617
  %v1669 = vpop.xlane.xlu0 %1668
  %1670 = vadd.xlane.f32.xlu0 %v1618
  %v1671 = vpop.xlane.xlu0 %1670
  %1672 = vadd.xlane.f32.xlu0 %v1619
  %v1673 = vpop.xlane.xlu0 %1672
  %1674 = vadd.xlane.f32.xlu0 %v1620
  %v1675 = vpop.xlane.xlu0 %1674
  %1676 = vadd.xlane.f32.xlu0 %v1621
  %v1677 = vpop.xlane.xlu0 %1676
  %1678 = vadd.xlane.f32.xlu0 %v1622
  %v1679 = vpop.xlane.xlu0 %1678
  %1680 = vadd.xlane.f32.xlu0 %v1623
  %v1681 = vpop.xlane.xlu0 %1680
  %1682 = vadd.xlane.f32.xlu0 %v1624
  %v1683 = vpop.xlane.xlu0 %1682
  %1684 = vadd.xlane.f32.xlu0 %v1625
  %v1685 = vpop.xlane.xlu0 %1684
  %1686 = vadd.xlane.f32.xlu0 %v1626
  %v1687 = vpop.xlane.xlu0 %1686
  %1688 = vadd.xlane.f32.xlu0 %v1627
  %v1689 = vpop.xlane.xlu0 %1688
  %1690 = vadd.xlane.f32.xlu0 %v1628
  %v1691 = vpop.xlane.xlu0 %1690
  %1692 = vadd.xlane.f32.xlu0 %v1629
  %v1693 = vpop.xlane.xlu0 %1692
  %v1694 = vadd.f32 %v1631, %v21
  %v1695 = vadd.f32 %v1633, %v21
  %v1696 = vadd.f32 %v1635, %v21
  %v1697 = vadd.f32 %v1637, %v21
  %v1698 = vadd.f32 %v1639, %v21
  %v1699 = vadd.f32 %v1641, %v21
  %v1700 = vadd.f32 %v1643, %v21
  %v1701 = vadd.f32 %v1645, %v21
  %v1702 = vadd.f32 %v1647, %v21
  %v1703 = vadd.f32 %v1649, %v21
  %v1704 = vadd.f32 %v1651, %v21
  %v1705 = vadd.f32 %v1653, %v21
  %v1706 = vadd.f32 %v1655, %v21
  %v1707 = vadd.f32 %v1657, %v21
  %v1708 = vadd.f32 %v1659, %v21
  %v1709 = vadd.f32 %v1661, %v21
  %v1710 = vadd.f32 %v1663, %v21
  %v1711 = vadd.f32 %v1665, %v21
  %v1712 = vadd.f32 %v1667, %v21
  %v1713 = vadd.f32 %v1669, %v21
  %v1714 = vadd.f32 %v1671, %v21
  %v1715 = vadd.f32 %v1673, %v21
  %v1716 = vadd.f32 %v1675, %v21
  %v1717 = vadd.f32 %v1677, %v21
  %v1718 = vadd.f32 %v1679, %v21
  %v1719 = vadd.f32 %v1681, %v21
  %v1720 = vadd.f32 %v1683, %v21
  %v1721 = vadd.f32 %v1685, %v21
  %v1722 = vadd.f32 %v1687, %v21
  %v1723 = vadd.f32 %v1689, %v21
  %v1724 = vadd.f32 %v1691, %v21
  %v1725 = vadd.f32 %v1693, %v21
  %v1726 = vpack.c.bf16 %v1537, %v1535
  %v1727 = vpack.c.bf16 %v1541, %v1539
  %v1728 = vpack.c.bf16 %v1545, %v1543
  %v1729 = vpack.c.bf16 %v1549, %v1547
  %v1730 = vpack.c.bf16 %v1553, %v1551
  %v1731 = vpack.c.bf16 %v1557, %v1555
  %v1732 = vpack.c.bf16 %v1561, %v1559
  %v1733 = vpack.c.bf16 %v1565, %v1563
  %v1734 = vpack.c.bf16 %v1569, %v1567
  %v1735 = vpack.c.bf16 %v1573, %v1571
  %v1736 = vpack.c.bf16 %v1577, %v1575
  %v1737 = vpack.c.bf16 %v1581, %v1579
  %v1738 = vpack.c.bf16 %v1585, %v1583
  %v1739 = vpack.c.bf16 %v1589, %v1587
  %v1740 = vpack.c.bf16 %v1593, %v1591
  %v1741 = vpack.c.bf16 %v1597, %v1595
  %v1758 = vunpack.c.l.b16 %v25
  %v1759 = vunpack.c.l.b16 %v26
  %v1760 = vunpack.c.l.b16 %v27
  %v1761 = vunpack.c.l.b16 %v28
  %v1762 = vunpack.c.l.b16 %v29
  %v1763 = vunpack.c.l.b16 %v30
  %v1764 = vunpack.c.l.b16 %v31
  %v1765 = vunpack.c.l.b16 %v32
  %v1766 = vunpack.c.l.b16 %v33
  %v1767 = vunpack.c.l.b16 %v34
  %v1768 = vunpack.c.l.b16 %v35
  %v1769 = vunpack.c.l.b16 %v36
  %v1770 = vunpack.c.l.b16 %v37
  %v1771 = vunpack.c.l.b16 %v38
  %v1772 = vunpack.c.l.b16 %v39
  %v1773 = vunpack.c.l.b16 %v40
  %v1774 = vpack.c.b16 %v1759, %v1758
  %v1775 = vpack.c.b16 %v1761, %v1760
  %v1776 = vpack.c.b16 %v1763, %v1762
  %v1777 = vpack.c.b16 %v1765, %v1764
  %v1778 = vpack.c.b16 %v1767, %v1766
  %v1779 = vpack.c.b16 %v1769, %v1768
  %v1780 = vpack.c.b16 %v1771, %v1770
  %v1781 = vpack.c.b16 %v1773, %v1772
  %1790 = vmatprep.subr.bf16.mxu0 0
  %1791 = vmatpush1.bf16.msra.mxu0 %v1781
  %1792 = vmatprep.subr.bf16.mxu0 0
  %1793 = vmatpush1.bf16.msra.mxu0 %v1780
  %1794 = vmatprep.subr.bf16.mxu0 0
  %1795 = vmatpush1.bf16.msra.mxu0 %v1779
  %1796 = vmatprep.subr.bf16.mxu0 0
  %1797 = vmatpush1.bf16.msra.mxu0 %v1778
  %1798 = vmatprep.subr.bf16.mxu0 0
  %1799 = vmatpush1.bf16.msra.mxu0 %v1777
  %1800 = vmatprep.subr.bf16.mxu0 0
  %1801 = vmatpush1.bf16.msra.mxu0 %v1776
  %1802 = vmatprep.subr.bf16.mxu0 0
  %1803 = vmatpush1.bf16.msra.mxu0 %v1775
  %1804 = vmatprep.subr.bf16.mxu0 0
  %1805 = vmatpush1.bf16.msra.mxu0 %v1774
  %1806 = vmatprep.subr.bf16.mxu0 0
  %1807 = vmatpush2.bf16.msra.mxu0 0
  %1808 = vmatprep.subr.bf16.mxu0 0
  %1809 = vmatpush2.bf16.msra.mxu0 0
  %1810 = vmatprep.subr.bf16.mxu0 0
  %1811 = vmatpush2.bf16.msra.mxu0 0
  %1812 = vmatprep.subr.bf16.mxu0 0
  %1813 = vmatpush2.bf16.msra.mxu0 0
  %1814 = vmatprep.subr.bf16.mxu0 0
  %1815 = vmatpush2.bf16.msra.mxu0 0
  %1816 = vmatprep.subr.bf16.mxu0 0
  %1817 = vmatpush2.bf16.msra.mxu0 0
  %1818 = vmatprep.subr.bf16.mxu0 0
  %1819 = vmatpush2.bf16.msra.mxu0 0
  %1820 = vmatprep.subr.bf16.mxu0 0
  %1821 = vmatpush2.bf16.msra.mxu0 0
  %1822 = vmatprep.mubr.bf16.mxu0 0
  %1823 = vmatmul.mubr.bf16.gmra.mxu0 %v1726
  %v1824 = vpop.f32.mrf.mxu0
  %v1825 = vadd.f32 %v19, %v1824
  %v1826 = vpop.f32.mrf.mxu0
  %v1827 = vpop.f32.mrf.mxu0
  %v1828 = vadd.f32 %v19, %v1827
  %v1829 = vpop.f32.mrf.mxu0
  %1830 = vmatprep.mubr.bf16.mxu0 0
  %1831 = vmatmul.mubr.bf16.gmra.mxu0 %v1727
  %v1832 = vpop.f32.mrf.mxu0
  %v1833 = vadd.f32 %v19, %v1832
  %v1834 = vpop.f32.mrf.mxu0
  %v1835 = vpop.f32.mrf.mxu0
  %v1836 = vadd.f32 %v19, %v1835
  %v1837 = vpop.f32.mrf.mxu0
  %1838 = vmatprep.mubr.bf16.mxu0 0
  %1839 = vmatmul.mubr.bf16.gmra.mxu0 %v1728
  %v1840 = vpop.f32.mrf.mxu0
  %v1841 = vadd.f32 %v19, %v1840
  %v1842 = vpop.f32.mrf.mxu0
  %v1843 = vpop.f32.mrf.mxu0
  %v1844 = vadd.f32 %v19, %v1843
  %v1845 = vpop.f32.mrf.mxu0
  %1846 = vmatprep.mubr.bf16.mxu0 0
  %1847 = vmatmul.mubr.bf16.gmra.mxu0 %v1729
  %v1848 = vpop.f32.mrf.mxu0
  %v1849 = vadd.f32 %v19, %v1848
  %v1850 = vpop.f32.mrf.mxu0
  %v1851 = vpop.f32.mrf.mxu0
  %v1852 = vadd.f32 %v19, %v1851
  %v1853 = vpop.f32.mrf.mxu0
  %1854 = vmatprep.mubr.bf16.mxu0 0
  %1855 = vmatmul.mubr.bf16.gmra.mxu0 %v1730
  %v1856 = vpop.f32.mrf.mxu0
  %v1857 = vadd.f32 %v19, %v1856
  %v1858 = vpop.f32.mrf.mxu0
  %v1859 = vpop.f32.mrf.mxu0
  %v1860 = vadd.f32 %v19, %v1859
  %v1861 = vpop.f32.mrf.mxu0
  %1862 = vmatprep.mubr.bf16.mxu0 0
  %1863 = vmatmul.mubr.bf16.gmra.mxu0 %v1731
  %v1864 = vpop.f32.mrf.mxu0
  %v1865 = vadd.f32 %v19, %v1864
  %v1866 = vpop.f32.mrf.mxu0
  %v1867 = vpop.f32.mrf.mxu0
  %v1868 = vadd.f32 %v19, %v1867
  %v1869 = vpop.f32.mrf.mxu0
  %1870 = vmatprep.mubr.bf16.mxu0 0
  %1871 = vmatmul.mubr.bf16.gmra.mxu0 %v1732
  %v1872 = vpop.f32.mrf.mxu0
  %v1873 = vadd.f32 %v19, %v1872
  %v1874 = vpop.f32.mrf.mxu0
  %v1875 = vpop.f32.mrf.mxu0
  %v1876 = vadd.f32 %v19, %v1875
  %v1877 = vpop.f32.mrf.mxu0
  %1878 = vmatprep.mubr.bf16.mxu0 0
  %1879 = vmatmul.mubr.bf16.gmra.mxu0 %v1733
  %v1880 = vpop.f32.mrf.mxu0
  %v1881 = vadd.f32 %v19, %v1880
  %v1882 = vpop.f32.mrf.mxu0
  %v1883 = vpop.f32.mrf.mxu0
  %v1884 = vadd.f32 %v19, %v1883
  %v1885 = vpop.f32.mrf.mxu0
  %1886 = vmatprep.mubr.bf16.mxu0 0
  %1887 = vmatmul.mubr.bf16.gmra.mxu0 %v1734
  %v1888 = vpop.f32.mrf.mxu0
  %v1889 = vadd.f32 %v19, %v1888
  %v1890 = vpop.f32.mrf.mxu0
  %v1891 = vpop.f32.mrf.mxu0
  %v1892 = vadd.f32 %v19, %v1891
  %v1893 = vpop.f32.mrf.mxu0
  %1894 = vmatprep.mubr.bf16.mxu0 0
  %1895 = vmatmul.mubr.bf16.gmra.mxu0 %v1735
  %v1896 = vpop.f32.mrf.mxu0
  %v1897 = vadd.f32 %v19, %v1896
  %v1898 = vpop.f32.mrf.mxu0
  %v1899 = vpop.f32.mrf.mxu0
  %v1900 = vadd.f32 %v19, %v1899
  %v1901 = vpop.f32.mrf.mxu0
  %1902 = vmatprep.mubr.bf16.mxu0 0
  %1903 = vmatmul.mubr.bf16.gmra.mxu0 %v1736
  %v1904 = vpop.f32.mrf.mxu0
  %v1905 = vadd.f32 %v19, %v1904
  %v1906 = vpop.f32.mrf.mxu0
  %v1907 = vpop.f32.mrf.mxu0
  %v1908 = vadd.f32 %v19, %v1907
  %v1909 = vpop.f32.mrf.mxu0
  %1910 = vmatprep.mubr.bf16.mxu0 0
  %1911 = vmatmul.mubr.bf16.gmra.mxu0 %v1737
  %v1912 = vpop.f32.mrf.mxu0
  %v1913 = vadd.f32 %v19, %v1912
  %v1914 = vpop.f32.mrf.mxu0
  %v1915 = vpop.f32.mrf.mxu0
  %v1916 = vadd.f32 %v19, %v1915
  %v1917 = vpop.f32.mrf.mxu0
  %1918 = vmatprep.mubr.bf16.mxu0 0
  %1919 = vmatmul.mubr.bf16.gmra.mxu0 %v1738
  %v1920 = vpop.f32.mrf.mxu0
  %v1921 = vadd.f32 %v19, %v1920
  %v1922 = vpop.f32.mrf.mxu0
  %v1923 = vpop.f32.mrf.mxu0
  %v1924 = vadd.f32 %v19, %v1923
  %v1925 = vpop.f32.mrf.mxu0
  %1926 = vmatprep.mubr.bf16.mxu0 0
  %1927 = vmatmul.mubr.bf16.gmra.mxu0 %v1739
  %v1928 = vpop.f32.mrf.mxu0
  %v1929 = vadd.f32 %v19, %v1928
  %v1930 = vpop.f32.mrf.mxu0
  %v1931 = vpop.f32.mrf.mxu0
  %v1932 = vadd.f32 %v19, %v1931
  %v1933 = vpop.f32.mrf.mxu0
  %1934 = vmatprep.mubr.bf16.mxu0 0
  %1935 = vmatmul.mubr.bf16.gmra.mxu0 %v1740
  %v1936 = vpop.f32.mrf.mxu0
  %v1937 = vadd.f32 %v19, %v1936
  %v1938 = vpop.f32.mrf.mxu0
  %v1939 = vpop.f32.mrf.mxu0
  %v1940 = vadd.f32 %v19, %v1939
  %v1941 = vpop.f32.mrf.mxu0
  %1942 = vmatprep.mubr.bf16.mxu0 0
  %1943 = vmatmul.mubr.bf16.gmra.mxu0 %v1741
  %v1944 = vpop.f32.mrf.mxu0
  %v1945 = vadd.f32 %v19, %v1944
  %v1946 = vpop.f32.mrf.mxu0
  %v1947 = vpop.f32.mrf.mxu0
  %v1948 = vadd.f32 %v19, %v1947
  %v1949 = vpop.f32.mrf.mxu0
  %1950 = vdwg.mxu0
  %v1951 = vmax.f32 %v1825, 0.0
  %v1952 = vmax.f32 %v1828, 0.0
  %v1953 = vmax.f32 %v1833, 0.0
  %v1954 = vmax.f32 %v1836, 0.0
  %v1955 = vmax.f32 %v1841, 0.0
  %v1956 = vmax.f32 %v1844, 0.0
  %v1957 = vmax.f32 %v1849, 0.0
  %v1958 = vmax.f32 %v1852, 0.0
  %v1959 = vmax.f32 %v1857, 0.0
  %v1960 = vmax.f32 %v1860, 0.0
  %v1961 = vmax.f32 %v1865, 0.0
  %v1962 = vmax.f32 %v1868, 0.0
  %v1963 = vmax.f32 %v1873, 0.0
  %v1964 = vmax.f32 %v1876, 0.0
  %v1965 = vmax.f32 %v1881, 0.0
  %v1966 = vmax.f32 %v1884, 0.0
  %v1967 = vmax.f32 %v1889, 0.0
  %v1968 = vmax.f32 %v1892, 0.0
  %v1969 = vmax.f32 %v1897, 0.0
  %v1970 = vmax.f32 %v1900, 0.0
  %v1971 = vmax.f32 %v1905, 0.0
  %v1972 = vmax.f32 %v1908, 0.0
  %v1973 = vmax.f32 %v1913, 0.0
  %v1974 = vmax.f32 %v1916, 0.0
  %v1975 = vmax.f32 %v1921, 0.0
  %v1976 = vmax.f32 %v1924, 0.0
  %v1977 = vmax.f32 %v1929, 0.0
  %v1978 = vmax.f32 %v1932, 0.0
  %v1979 = vmax.f32 %v1937, 0.0
  %v1980 = vmax.f32 %v1940, 0.0
  %v1981 = vmax.f32 %v1945, 0.0
  %v1982 = vmax.f32 %v1948, 0.0
  %v1983 = vpack.c.bf16 %v1952, %v1951
  %v1984 = vpack.c.bf16 %v1954, %v1953
  %v1985 = vpack.c.bf16 %v1956, %v1955
  %v1986 = vpack.c.bf16 %v1958, %v1957
  %v1987 = vpack.c.bf16 %v1960, %v1959
  %v1988 = vpack.c.bf16 %v1962, %v1961
  %v1989 = vpack.c.bf16 %v1964, %v1963
  %v1990 = vpack.c.bf16 %v1966, %v1965
  %v1991 = vpack.c.bf16 %v1968, %v1967
  %v1992 = vpack.c.bf16 %v1970, %v1969
  %v1993 = vpack.c.bf16 %v1972, %v1971
  %v1994 = vpack.c.bf16 %v1974, %v1973
  %v1995 = vpack.c.bf16 %v1976, %v1975
  %v1996 = vpack.c.bf16 %v1978, %v1977
  %v1997 = vpack.c.bf16 %v1980, %v1979
  %v1998 = vpack.c.bf16 %v1982, %v1981
  %v2015 = vunpack.c.l.b16 %v41
  %v2016 = vunpack.c.l.b16 %v42
  %v2017 = vunpack.c.l.b16 %v43
  %v2018 = vunpack.c.l.b16 %v44
  %v2019 = vunpack.c.l.b16 %v45
  %v2020 = vunpack.c.l.b16 %v46
  %v2021 = vunpack.c.l.b16 %v47
  %v2022 = vunpack.c.l.b16 %v48
  %v2023 = vunpack.c.l.b16 %v49
  %v2024 = vunpack.c.l.b16 %v50
  %v2025 = vunpack.c.l.b16 %v51
  %v2026 = vunpack.c.l.b16 %v52
  %v2027 = vunpack.c.l.b16 %v53
  %v2028 = vunpack.c.l.b16 %v54
  %v2029 = vunpack.c.l.b16 %v55
  %v2030 = vunpack.c.l.b16 %v56
  %v2031 = vpack.c.b16 %v2016, %v2015
  %v2032 = vpack.c.b16 %v2018, %v2017
  %v2033 = vpack.c.b16 %v2020, %v2019
  %v2034 = vpack.c.b16 %v2022, %v2021
  %v2035 = vpack.c.b16 %v2024, %v2023
  %v2036 = vpack.c.b16 %v2026, %v2025
  %v2037 = vpack.c.b16 %v2028, %v2027
  %v2038 = vpack.c.b16 %v2030, %v2029
  %2047 = vmatprep.subr.bf16.mxu0 0
  %2048 = vmatpush1.bf16.msra.mxu0 %v2038
  %2049 = vmatprep.subr.bf16.mxu0 0
  %2050 = vmatpush1.bf16.msra.mxu0 %v2037
  %2051 = vmatprep.subr.bf16.mxu0 0
  %2052 = vmatpush1.bf16.msra.mxu0 %v2036
  %2053 = vmatprep.subr.bf16.mxu0 0
  %2054 = vmatpush1.bf16.msra.mxu0 %v2035
  %2055 = vmatprep.subr.bf16.mxu0 0
  %2056 = vmatpush1.bf16.msra.mxu0 %v2034
  %2057 = vmatprep.subr.bf16.mxu0 0
  %2058 = vmatpush1.bf16.msra.mxu0 %v2033
  %2059 = vmatprep.subr.bf16.mxu0 0
  %2060 = vmatpush1.bf16.msra.mxu0 %v2032
  %2061 = vmatprep.subr.bf16.mxu0 0
  %2062 = vmatpush1.bf16.msra.mxu0 %v2031
  %2063 = vmatprep.subr.bf16.mxu0 0
  %2064 = vmatpush2.bf16.msra.mxu0 0
  %2065 = vmatprep.subr.bf16.mxu0 0
  %2066 = vmatpush2.bf16.msra.mxu0 0
  %2067 = vmatprep.subr.bf16.mxu0 0
  %2068 = vmatpush2.bf16.msra.mxu0 0
  %2069 = vmatprep.subr.bf16.mxu0 0
  %2070 = vmatpush2.bf16.msra.mxu0 0
  %2071 = vmatprep.subr.bf16.mxu0 0
  %2072 = vmatpush2.bf16.msra.mxu0 0
  %2073 = vmatprep.subr.bf16.mxu0 0
  %2074 = vmatpush2.bf16.msra.mxu0 0
  %2075 = vmatprep.subr.bf16.mxu0 0
  %2076 = vmatpush2.bf16.msra.mxu0 0
  %2077 = vmatprep.subr.bf16.mxu0 0
  %2078 = vmatpush2.bf16.msra.mxu0 0
  %2079 = vmatprep.mubr.bf16.mxu0 0
  %2080 = vmatmul.mubr.bf16.gmra.mxu0 %v1983
  %v2081 = vpop.f32.mrf.mxu0
  %v2082 = vadd.f32 %v22, %v2081
  %v2083 = vpop.f32.mrf.mxu0
  %v2084 = vpop.f32.mrf.mxu0
  %v2085 = vadd.f32 %v22, %v2084
  %v2086 = vpop.f32.mrf.mxu0
  %2087 = vmatprep.mubr.bf16.mxu0 0
  %2088 = vmatmul.mubr.bf16.gmra.mxu0 %v1984
  %v2089 = vpop.f32.mrf.mxu0
  %v2090 = vadd.f32 %v22, %v2089
  %v2091 = vpop.f32.mrf.mxu0
  %v2092 = vpop.f32.mrf.mxu0
  %v2093 = vadd.f32 %v22, %v2092
  %v2094 = vpop.f32.mrf.mxu0
  %2095 = vmatprep.mubr.bf16.mxu0 0
  %2096 = vmatmul.mubr.bf16.gmra.mxu0 %v1985
  %v2097 = vpop.f32.mrf.mxu0
  %v2098 = vadd.f32 %v22, %v2097
  %v2099 = vpop.f32.mrf.mxu0
  %v2100 = vpop.f32.mrf.mxu0
  %v2101 = vadd.f32 %v22, %v2100
  %v2102 = vpop.f32.mrf.mxu0
  %2103 = vmatprep.mubr.bf16.mxu0 0
  %2104 = vmatmul.mubr.bf16.gmra.mxu0 %v1986
  %v2105 = vpop.f32.mrf.mxu0
  %v2106 = vadd.f32 %v22, %v2105
  %v2107 = vpop.f32.mrf.mxu0
  %v2108 = vpop.f32.mrf.mxu0
  %v2109 = vadd.f32 %v22, %v2108
  %v2110 = vpop.f32.mrf.mxu0
  %2111 = vmatprep.mubr.bf16.mxu0 0
  %2112 = vmatmul.mubr.bf16.gmra.mxu0 %v1987
  %v2113 = vpop.f32.mrf.mxu0
  %v2114 = vadd.f32 %v22, %v2113
  %v2115 = vpop.f32.mrf.mxu0
  %v2116 = vpop.f32.mrf.mxu0
  %v2117 = vadd.f32 %v22, %v2116
  %v2118 = vpop.f32.mrf.mxu0
  %2119 = vmatprep.mubr.bf16.mxu0 0
  %2120 = vmatmul.mubr.bf16.gmra.mxu0 %v1988
  %v2121 = vpop.f32.mrf.mxu0
  %v2122 = vadd.f32 %v22, %v2121
  %v2123 = vpop.f32.mrf.mxu0
  %v2124 = vpop.f32.mrf.mxu0
  %v2125 = vadd.f32 %v22, %v2124
  %v2126 = vpop.f32.mrf.mxu0
  %2127 = vmatprep.mubr.bf16.mxu0 0
  %2128 = vmatmul.mubr.bf16.gmra.mxu0 %v1989
  %v2129 = vpop.f32.mrf.mxu0
  %v2130 = vadd.f32 %v22, %v2129
  %v2131 = vpop.f32.mrf.mxu0
  %v2132 = vpop.f32.mrf.mxu0
  %v2133 = vadd.f32 %v22, %v2132
  %v2134 = vpop.f32.mrf.mxu0
  %2135 = vmatprep.mubr.bf16.mxu0 0
  %2136 = vmatmul.mubr.bf16.gmra.mxu0 %v1990
  %v2137 = vpop.f32.mrf.mxu0
  %v2138 = vadd.f32 %v22, %v2137
  %v2139 = vpop.f32.mrf.mxu0
  %v2140 = vpop.f32.mrf.mxu0
  %v2141 = vadd.f32 %v22, %v2140
  %v2142 = vpop.f32.mrf.mxu0
  %2143 = vmatprep.mubr.bf16.mxu0 0
  %2144 = vmatmul.mubr.bf16.gmra.mxu0 %v1991
  %v2145 = vpop.f32.mrf.mxu0
  %v2146 = vadd.f32 %v22, %v2145
  %v2147 = vpop.f32.mrf.mxu0
  %v2148 = vpop.f32.mrf.mxu0
  %v2149 = vadd.f32 %v22, %v2148
  %v2150 = vpop.f32.mrf.mxu0
  %2151 = vmatprep.mubr.bf16.mxu0 0
  %2152 = vmatmul.mubr.bf16.gmra.mxu0 %v1992
  %v2153 = vpop.f32.mrf.mxu0
  %v2154 = vadd.f32 %v22, %v2153
  %v2155 = vpop.f32.mrf.mxu0
  %v2156 = vpop.f32.mrf.mxu0
  %v2157 = vadd.f32 %v22, %v2156
  %v2158 = vpop.f32.mrf.mxu0
  %2159 = vmatprep.mubr.bf16.mxu0 0
  %2160 = vmatmul.mubr.bf16.gmra.mxu0 %v1993
  %v2161 = vpop.f32.mrf.mxu0
  %v2162 = vadd.f32 %v22, %v2161
  %v2163 = vpop.f32.mrf.mxu0
  %v2164 = vpop.f32.mrf.mxu0
  %v2165 = vadd.f32 %v22, %v2164
  %v2166 = vpop.f32.mrf.mxu0
  %2167 = vmatprep.mubr.bf16.mxu0 0
  %2168 = vmatmul.mubr.bf16.gmra.mxu0 %v1994
  %v2169 = vpop.f32.mrf.mxu0
  %v2170 = vadd.f32 %v22, %v2169
  %v2171 = vpop.f32.mrf.mxu0
  %v2172 = vpop.f32.mrf.mxu0
  %v2173 = vadd.f32 %v22, %v2172
  %v2174 = vpop.f32.mrf.mxu0
  %2175 = vmatprep.mubr.bf16.mxu0 0
  %2176 = vmatmul.mubr.bf16.gmra.mxu0 %v1995
  %v2177 = vpop.f32.mrf.mxu0
  %v2178 = vadd.f32 %v22, %v2177
  %v2179 = vpop.f32.mrf.mxu0
  %v2180 = vpop.f32.mrf.mxu0
  %v2181 = vadd.f32 %v22, %v2180
  %v2182 = vpop.f32.mrf.mxu0
  %2183 = vmatprep.mubr.bf16.mxu0 0
  %2184 = vmatmul.mubr.bf16.gmra.mxu0 %v1996
  %v2185 = vpop.f32.mrf.mxu0
  %v2186 = vadd.f32 %v22, %v2185
  %v2187 = vpop.f32.mrf.mxu0
  %v2188 = vpop.f32.mrf.mxu0
  %v2189 = vadd.f32 %v22, %v2188
  %v2190 = vpop.f32.mrf.mxu0
  %2191 = vmatprep.mubr.bf16.mxu0 0
  %2192 = vmatmul.mubr.bf16.gmra.mxu0 %v1997
  %v2193 = vpop.f32.mrf.mxu0
  %v2194 = vadd.f32 %v22, %v2193
  %v2195 = vpop.f32.mrf.mxu0
  %v2196 = vpop.f32.mrf.mxu0
  %v2197 = vadd.f32 %v22, %v2196
  %v2198 = vpop.f32.mrf.mxu0
  %2199 = vmatprep.mubr.bf16.mxu0 0
  %2200 = vmatmul.mubr.bf16.gmra.mxu0 %v1998
  %v2201 = vpop.f32.mrf.mxu0
  %v2202 = vadd.f32 %v22, %v2201
  %v2203 = vpop.f32.mrf.mxu0
  %v2204 = vpop.f32.mrf.mxu0
  %v2205 = vadd.f32 %v22, %v2204
  %v2206 = vpop.f32.mrf.mxu0
  %2207 = vdwg.mxu0
  %v2208 = vlaneseq
  %v2209 = vand.u32 %v2208, 127
  %vm2210 = vcmp.eq.s32.totalorder %v2209, 32
  %2212 = vset.pattern.permute.xlu0 0
  %2213 = vperm.xlu0 %2212, %v1694
  %v2214 = vpop.permute.xlu0 %2213
  %2217 = vset.pattern.permute.xlu0 0
  %2218 = vperm.xlu0 %2217, %v1695
  %v2219 = vpop.permute.xlu0 %2218
  %2222 = vset.pattern.permute.xlu0 0
  %2223 = vperm.xlu0 %2222, %v1696
  %v2224 = vpop.permute.xlu0 %2223
  %2227 = vset.pattern.permute.xlu0 0
  %2228 = vperm.xlu0 %2227, %v1697
  %v2229 = vpop.permute.xlu0 %2228
  %2232 = vset.pattern.permute.xlu0 0
  %2233 = vperm.xlu0 %2232, %v1698
  %v2234 = vpop.permute.xlu0 %2233
  %2237 = vset.pattern.permute.xlu0 0
  %2238 = vperm.xlu0 %2237, %v1699
  %v2239 = vpop.permute.xlu0 %2238
  %2242 = vset.pattern.permute.xlu0 0
  %2243 = vperm.xlu0 %2242, %v1700
  %v2244 = vpop.permute.xlu0 %2243
  %2247 = vset.pattern.permute.xlu0 0
  %2248 = vperm.xlu0 %2247, %v1701
  %v2249 = vpop.permute.xlu0 %2248
  %2252 = vset.pattern.permute.xlu0 0
  %2253 = vperm.xlu0 %2252, %v1702
  %v2254 = vpop.permute.xlu0 %2253
  %2257 = vset.pattern.permute.xlu0 0
  %2258 = vperm.xlu0 %2257, %v1703
  %v2259 = vpop.permute.xlu0 %2258
  %2262 = vset.pattern.permute.xlu0 0
  %2263 = vperm.xlu0 %2262, %v1704
  %v2264 = vpop.permute.xlu0 %2263
  %2267 = vset.pattern.permute.xlu0 0
  %2268 = vperm.xlu0 %2267, %v1705
  %v2269 = vpop.permute.xlu0 %2268
  %2272 = vset.pattern.permute.xlu0 0
  %2273 = vperm.xlu0 %2272, %v1706
  %v2274 = vpop.permute.xlu0 %2273
  %2277 = vset.pattern.permute.xlu0 0
  %2278 = vperm.xlu0 %2277, %v1707
  %v2279 = vpop.permute.xlu0 %2278
  %2282 = vset.pattern.permute.xlu0 0
  %2283 = vperm.xlu0 %2282, %v1708
  %v2284 = vpop.permute.xlu0 %2283
  %2287 = vset.pattern.permute.xlu0 0
  %2288 = vperm.xlu0 %2287, %v1709
  %v2289 = vpop.permute.xlu0 %2288
  %2292 = vset.pattern.permute.xlu0 0
  %2293 = vperm.xlu0 %2292, %v1710
  %v2294 = vpop.permute.xlu0 %2293
  %2297 = vset.pattern.permute.xlu0 0
  %2298 = vperm.xlu0 %2297, %v1711
  %v2299 = vpop.permute.xlu0 %2298
  %2302 = vset.pattern.permute.xlu0 0
  %2303 = vperm.xlu0 %2302, %v1712
  %v2304 = vpop.permute.xlu0 %2303
  %2307 = vset.pattern.permute.xlu0 0
  %2308 = vperm.xlu0 %2307, %v1713
  %v2309 = vpop.permute.xlu0 %2308
  %2312 = vset.pattern.permute.xlu0 0
  %2313 = vperm.xlu0 %2312, %v1714
  %v2314 = vpop.permute.xlu0 %2313
  %2317 = vset.pattern.permute.xlu0 0
  %2318 = vperm.xlu0 %2317, %v1715
  %v2319 = vpop.permute.xlu0 %2318
  %2322 = vset.pattern.permute.xlu0 0
  %2323 = vperm.xlu0 %2322, %v1716
  %v2324 = vpop.permute.xlu0 %2323
  %2327 = vset.pattern.permute.xlu0 0
  %2328 = vperm.xlu0 %2327, %v1717
  %v2329 = vpop.permute.xlu0 %2328
  %2332 = vset.pattern.permute.xlu0 0
  %2333 = vperm.xlu0 %2332, %v1718
  %v2334 = vpop.permute.xlu0 %2333
  %2337 = vset.pattern.permute.xlu0 0
  %2338 = vperm.xlu0 %2337, %v1719
  %v2339 = vpop.permute.xlu0 %2338
  %2342 = vset.pattern.permute.xlu0 0
  %2343 = vperm.xlu0 %2342, %v1720
  %v2344 = vpop.permute.xlu0 %2343
  %2347 = vset.pattern.permute.xlu0 0
  %2348 = vperm.xlu0 %2347, %v1721
  %v2349 = vpop.permute.xlu0 %2348
  %2352 = vset.pattern.permute.xlu0 0
  %2353 = vperm.xlu0 %2352, %v1722
  %v2354 = vpop.permute.xlu0 %2353
  %2357 = vset.pattern.permute.xlu0 0
  %2358 = vperm.xlu0 %2357, %v1723
  %v2359 = vpop.permute.xlu0 %2358
  %2362 = vset.pattern.permute.xlu0 0
  %2363 = vperm.xlu0 %2362, %v1724
  %v2364 = vpop.permute.xlu0 %2363
  %2367 = vset.pattern.permute.xlu0 0
  %2368 = vperm.xlu0 %2367, %v1725
  %v2369 = vpop.permute.xlu0 %2368
  %v2371 = vsel %vm2210, %v2214, %v2082
  %v2372 = vsel %vm2210, %v2219, %v2085
  %v2373 = vsel %vm2210, %v2224, %v2090
  %v2374 = vsel %vm2210, %v2229, %v2093
  %v2375 = vsel %vm2210, %v2234, %v2098
  %v2376 = vsel %vm2210, %v2239, %v2101
  %v2377 = vsel %vm2210, %v2244, %v2106
  %v2378 = vsel %vm2210, %v2249, %v2109
  %v2379 = vsel %vm2210, %v2254, %v2114
  %v2380 = vsel %vm2210, %v2259, %v2117
  %v2381 = vsel %vm2210, %v2264, %v2122
  %v2382 = vsel %vm2210, %v2269, %v2125
  %v2383 = vsel %vm2210, %v2274, %v2130
  %v2384 = vsel %vm2210, %v2279, %v2133
  %v2385 = vsel %vm2210, %v2284, %v2138
  %v2386 = vsel %vm2210, %v2289, %v2141
  %v2387 = vsel %vm2210, %v2294, %v2146
  %v2388 = vsel %vm2210, %v2299, %v2149
  %v2389 = vsel %vm2210, %v2304, %v2154
  %v2390 = vsel %vm2210, %v2309, %v2157
  %v2391 = vsel %vm2210, %v2314, %v2162
  %v2392 = vsel %vm2210, %v2319, %v2165
  %v2393 = vsel %vm2210, %v2324, %v2170
  %v2394 = vsel %vm2210, %v2329, %v2173
  %v2395 = vsel %vm2210, %v2334, %v2178
  %v2396 = vsel %vm2210, %v2339, %v2181
  %v2397 = vsel %vm2210, %v2344, %v2186
  %v2398 = vsel %vm2210, %v2349, %v2189
  %v2399 = vsel %vm2210, %v2354, %v2194
  %v2400 = vsel %vm2210, %v2359, %v2197
  %v2401 = vsel %vm2210, %v2364, %v2202
  %v2402 = vsel %vm2210, %v2369, %v2205
  %2403 = vst [vmem:[%s4] sm:$0xff] %v2371
  %2404 = vst [vmem:[%s4 + $0x8] sm:$0xff] %v2372
  %2405 = vst [vmem:[%s4 + $0x10] sm:$0xff] %v2373
  %2406 = vst [vmem:[%s4 + $0x18] sm:$0xff] %v2374
  %2407 = vst [vmem:[%s4 + $0x20] sm:$0xff] %v2375
  %2408 = vst [vmem:[%s4 + $0x28] sm:$0xff] %v2376
  %2409 = vst [vmem:[%s4 + $0x30] sm:$0xff] %v2377
  %2410 = vst [vmem:[%s4 + $0x38] sm:$0xff] %v2378
  %2411 = vst [vmem:[%s4 + $0x40] sm:$0xff] %v2379
  %2412 = vst [vmem:[%s4 + $0x48] sm:$0xff] %v2380
  %2413 = vst [vmem:[%s4 + $0x50] sm:$0xff] %v2381
  %2414 = vst [vmem:[%s4 + $0x58] sm:$0xff] %v2382
  %2415 = vst [vmem:[%s4 + $0x60] sm:$0xff] %v2383
  %2416 = vst [vmem:[%s4 + $0x68] sm:$0xff] %v2384
  %2417 = vst [vmem:[%s4 + $0x70] sm:$0xff] %v2385
  %2418 = vst [vmem:[%s4 + $0x78] sm:$0xff] %v2386
  %2419 = vst [vmem:[%s4 + $0x80] sm:$0xff] %v2387
  %2420 = vst [vmem:[%s4 + $0x88] sm:$0xff] %v2388
  %2421 = vst [vmem:[%s4 + $0x90] sm:$0xff] %v2389
  %2422 = vst [vmem:[%s4 + $0x98] sm:$0xff] %v2390
  %2423 = vst [vmem:[%s4 + $0xa0] sm:$0xff] %v2391
  %2424 = vst [vmem:[%s4 + $0xa8] sm:$0xff] %v2392
  %2425 = vst [vmem:[%s4 + $0xb0] sm:$0xff] %v2393
  %2426 = vst [vmem:[%s4 + $0xb8] sm:$0xff] %v2394
  %2427 = vst [vmem:[%s4 + $0xc0] sm:$0xff] %v2395
  %2428 = vst [vmem:[%s4 + $0xc8] sm:$0xff] %v2396
  %2429 = vst [vmem:[%s4 + $0xd0] sm:$0xff] %v2397
  %2430 = vst [vmem:[%s4 + $0xd8] sm:$0xff] %v2398
  %2431 = vst [vmem:[%s4 + $0xe0] sm:$0xff] %v2399
  %2432 = vst [vmem:[%s4 + $0xe8] sm:$0xff] %v2400
  %2433 = vst [vmem:[%s4 + $0xf0] sm:$0xff] %v2401
  %2434 = vst [vmem:[%s4 + $0xf8] sm:$0xff] %v2402
  // Predicated region
  $region18: #{dynamics_forward.1} parent=0 // pred_check
    _
  $region19: #{dynamics_forward.1} parent=0 // pred_check_branch
    %2436 = sbr.rel (0) target = $region21
  $region20: #{dynamics_forward.1} parent=0 // pred_region
    _
  $region21: #{dynamics_forward.1} parent=0 // pred_fallthru
    _
  // Predicated region
  $region22: #{dynamics_forward.1} parent=0 // pred_check
    _
  $region23: #{dynamics_forward.1} parent=0 // pred_check_branch
    %2438 = sbr.rel (0) target = $region25
  $region24: #{dynamics_forward.1} parent=0 // pred_region
    _
  $region25: #{dynamics_forward.1} parent=0 // pred_fallthru
    _

</llo_original>
